<compile_context>
chip_gen: v5e
topology: v5e:2x2
jax: 0.10.0
libtpu: 0.0.40
codegen_flags: <defaults>
</compile_context>

<pallas_src>
import functools

import jax
import jax.numpy as jnp
from jax import lax
from jax.experimental import pallas as pl
from jax.experimental.pallas import tpu as pltpu


# ------------------------------- fused kernel ---------------------------------
def basic_block_kernel(x_ref, w1t_ref, w1cs_ref, w1b_ref, b1_ref,
                       w2t_ref, w2c_ref, w2b_ref, b2_ref, bsc_ref,
                       fc1_ref, fc2_ref, bsum_ref, bexp_ref, out_ref,
                       *, b_tile, h, w, c):
    """One block of `b_tile` images per grid step; activations lane-packed (B*H, W*C)."""
    f32 = jnp.float32
    wc = w * c
    bh = b_tile * h
    mxu_dtype = w2c_ref.dtype            # bf16 when pack_params(use_bf16=True), else f32

    x = x_ref[...]                       # (B*H, W*Cin)

    # Per-image border masks (SAME zero padding in the height direction).  Row r of the
    # block belongs to image r // h; its top/bottom borders are r % h == 0 / h-1.
    row = lax.broadcasted_iota(jnp.int32, (bh, 1), 0)
    is_top = (row % h) == 0
    is_bot = (row % h) == (h - 1)

    def shift_up(a):                     # a[i-1] per image, zero at each image's row 0
        return jnp.where(is_top, 0.0, pltpu.roll(a, shift=1, axis=0))

    def shift_dn(a):                     # a[i+1] per image, zero at each image's row h-1
        # roll by bh-1 == roll by -1 (wrapped rows are masked anyway).
        return jnp.where(is_bot, 0.0, pltpu.roll(a, shift=bh - 1, axis=0))

    # ---- conv1 (+ fused shortcut) -> BN1(folded) -> ReLU --------------------------
    xm = x.astype(mxu_dtype)
    ctr = jnp.dot(xm, w1cs_ref[...], preferred_element_type=f32)     # (B*H, 2*W*C)
    o1 = ctr[:, :wc]                                                  # conv1 centre band
    sc = ctr[:, wc:] + bsc_ref[...]                                   # shortcut (1x1+BN)
    o1 = o1 + jnp.dot(shift_up(x).astype(mxu_dtype), w1t_ref[...],
                      preferred_element_type=f32)
    o1 = o1 + jnp.dot(shift_dn(x).astype(mxu_dtype), w1b_ref[...],
                      preferred_element_type=f32)
    o1 = jnp.maximum(o1 + b1_ref[...], 0.0)

    # Dropout(p=0.0) in eval mode is the identity.

    # ---- conv2 -> BN2(folded) ------------------------------------------------------
    o2 = jnp.dot(o1.astype(mxu_dtype), w2c_ref[...], preferred_element_type=f32)
    o2 = o2 + jnp.dot(shift_up(o1).astype(mxu_dtype), w2t_ref[...],
                      preferred_element_type=f32)
    o2 = o2 + jnp.dot(shift_dn(o1).astype(mxu_dtype), w2b_ref[...],
                      preferred_element_type=f32)
    o2 = o2 + b2_ref[...]                                             # (B*H, W*C)

    # ---- SE: per-image avg-pool (XLU sublane reduce) -> fc1 -> ReLU -> fc2 -> sigmoid
    o2_img = o2.reshape(b_tile, h, wc)                                # leading-dim split
    pooled = jnp.sum(o2_img, axis=1) * (1.0 / (h * w))                # (B, W*C)
    pooled_c = jnp.dot(pooled, bsum_ref[...], preferred_element_type=f32)   # (B, C)
    hid = jnp.maximum(jnp.dot(pooled_c, fc1_ref[...], preferred_element_type=f32), 0.0)
    gch = jax.nn.sigmoid(jnp.dot(hid, fc2_ref[...], preferred_element_type=f32))  # (B, C)
    gate = jnp.dot(gch, bexp_ref[...], preferred_element_type=f32)    # (B, W*C)
    gated = (o2_img * gate[:, None, :]).reshape(bh, wc)               # per-image gating

    # ---- residual add + final ReLU --------------------------------------------------
    out_ref[...] = jnp.maximum(gated + sc, 0.0)


# --------------------------------- wrapper -------------------------------------
def _choose_b_tile(n, h, target_rows=128, min_grid=1):
    """Largest divisor of n with b*h <= target_rows (and at least min_grid blocks)."""
    best = 1
    for d in range(1, n + 1):
        if n % d == 0 and d * h <= max(target_rows, h) and n // d >= min_grid:
            best = d
    return best


def basic_block_forward(x_nhwc, pk, *, b_tile=None, min_grid=1):
    N, H, W, Cin = x_nhwc.shape
    C = pk["planes"]
    WC = W * C
    if b_tile is None:
        # min_grid=2 keeps both v7x TensorCores busy; on v5e/v6e a single fat block wins.
        b_tile = _choose_b_tile(N, H, target_rows=128, min_grid=min_grid)
    assert N % b_tile == 0

    x2 = x_nhwc.reshape(N * H, W * Cin)               # lane-packed rows (contiguous)

    def full_spec(a):
        zeros = (0,) * a.ndim
        return pl.BlockSpec(a.shape, lambda n, _z=zeros: _z)

    names = ["w1t", "w1cs", "w1b", "b1", "w2t", "w2c", "w2b", "b2",
             "bsc", "fc1", "fc2", "bsum", "bexp"]
    in_specs = ([pl.BlockSpec((b_tile * H, W * Cin), lambda n: (n, 0))]
                + [full_spec(pk[k]) for k in names])

    kernel = functools.partial(basic_block_kernel, b_tile=b_tile, h=H, w=W, c=C)

    out2 = pl.pallas_call(
        kernel,
        out_shape=jax.ShapeDtypeStruct((N * H, WC), jnp.float32),
        grid=(N // b_tile,),
        in_specs=in_specs,
        out_specs=pl.BlockSpec((b_tile * H, WC), lambda n: (n, 0)),
        compiler_params=pltpu.CompilerParams(
            dimension_semantics=("parallel",),
            vmem_limit_bytes=32 * 1024 * 1024),
    )(x2, *[pk[k] for k in names])
    return out2.reshape(N, H, W, C)


# ----------------------------- parameter packing --------------------------------
def fold_bn(gamma, beta, mean, var, eps=1e-5):
    scale = gamma / jnp.sqrt(var + eps)
    return scale, beta - mean * scale


def pack_params(raw, H, W, use_bf16=False):
    """Fold BN into weights; build lane-packed banded matrices and SE constants."""
    f32 = jnp.float32
    Cin = raw["w1_hwio"].shape[2]
    C = raw["w1_hwio"].shape[3]
    wdt = jnp.bfloat16 if use_bf16 else f32

    def banded_rows(w_hwio, scale):
        # (3,3,Ci,Co) -> 3 x (W*Ci, W*Co): width taps, SAME padding, BN scale folded in.
        wsc = w_hwio * scale                            # scale per output channel
        rows = []
        for kh in range(3):
            band = jnp.zeros((W * wsc.shape[2], W * wsc.shape[3]), f32)
            for kw in range(3):
                band = band + jnp.kron(jnp.eye(W, k=1 - kw, dtype=f32), wsc[kh, kw])
            rows.append(band)
        return rows

    w1_rows = banded_rows(raw["w1_hwio"], raw["bn1_scale"])
    w2_rows = banded_rows(raw["w2_hwio"], raw["bn2_scale"])

    # Shortcut: projection (1x1 conv + BN) when given, identity otherwise (in==out planes).
    if raw.get("wsc") is not None:
        wsc_eff = raw["wsc"] * raw["bnsc_scale"]
        bsc_vec = raw["bnsc_bias"]
    else:
        assert Cin == C, "identity shortcut requires in_planes == planes"
        wsc_eff = jnp.eye(C, dtype=f32)
        bsc_vec = jnp.zeros((C,), f32)
    wscb = jnp.kron(jnp.eye(W, dtype=f32), wsc_eff)
    # Fuse shortcut into conv1's centre band: one matmul computes both.
    w1cs = jnp.concatenate([w1_rows[1], wscb], axis=1)   # (W*Cin, 2*W*C)

    # SE fc weights; hidden dim zero-padded to >=8 (exact: ReLU(0)=0 contributes nothing).
    Cr = raw["fc1"].shape[1]
    Crp = max(8, Cr)
    fc1 = jnp.zeros((C, Crp), f32).at[:, :Cr].set(raw["fc1"])
    fc2 = jnp.zeros((Crp, C), f32).at[:Cr, :].set(raw["fc2"])

    eye_c = jnp.eye(C, dtype=f32)
    tile_bias = lambda b: jnp.tile(b, W)[None, :].astype(f32)   # lane layout l = j*C + c
    cast = lambda a: a.astype(wdt)
    return dict(
        planes=C,
        w1t=cast(w1_rows[0]), w1cs=cast(w1cs), w1b=cast(w1_rows[2]),
        b1=tile_bias(raw["bn1_bias"]),
        w2t=cast(w2_rows[0]), w2c=cast(w2_rows[1]), w2b=cast(w2_rows[2]),
        b2=tile_bias(raw["bn2_bias"]),
        bsc=tile_bias(bsc_vec),
        fc1=fc1, fc2=fc2,
        bsum=jnp.kron(jnp.ones((W, 1), f32), eye_c),     # (W*C, C): fold width blocks
        bexp=jnp.kron(jnp.ones((1, W), f32), eye_c),     # (C, W*C): expand gate over width
    )


def make_params(key, in_planes, planes, reduction=16):
    ks = jax.random.split(key, 8)
    w1 = 0.1 * jax.random.normal(ks[0], (3, 3, in_planes, planes), jnp.float32)
    w2 = 0.1 * jax.random.normal(ks[1], (3, 3, planes, planes), jnp.float32)
    wsc = 0.1 * jax.random.normal(ks[2], (in_planes, planes), jnp.float32)
    hidden = max(planes // reduction, 1)
    fc1 = 0.3 * jax.random.normal(ks[3], (planes, hidden), jnp.float32)
    fc2 = 0.3 * jax.random.normal(ks[4], (hidden, planes), jnp.float32)

    def bn(k):
        k1, k2, k3, k4 = jax.random.split(k, 4)
        gamma = 1.0 + 0.1 * jax.random.normal(k1, (planes,), jnp.float32)
        beta = 0.1 * jax.random.normal(k2, (planes,), jnp.float32)
        mean = 0.1 * jax.random.normal(k3, (planes,), jnp.float32)
        var = jax.random.uniform(k4, (planes,), jnp.float32, 0.5, 1.5)
        return fold_bn(gamma, beta, mean, var)

    s1, b1 = bn(ks[5]); s2, b2 = bn(ks[6]); ssc, bsc = bn(ks[7])
    return dict(w1_hwio=w1, w2_hwio=w2, wsc=wsc, fc1=fc1, fc2=fc2,
                bn1_scale=s1, bn1_bias=b1, bn2_scale=s2, bn2_bias=b2,
                bnsc_scale=ssc, bnsc_bias=bsc)


# ---------------------------- reference (pure JAX) ------------------------------
def basic_block_ref(x, raw):
    P = lax.Precision.HIGHEST
    def conv3x3(a, w):
        return lax.conv_general_dilated(a, w, (1, 1), "SAME",
                                        dimension_numbers=("NHWC", "HWIO", "NHWC"),
                                        precision=P)
    o = conv3x3(x, raw["w1_hwio"]) * raw["bn1_scale"] + raw["bn1_bias"]
    o = jnp.maximum(o, 0.0)
    o = conv3x3(o, raw["w2_hwio"]) * raw["bn2_scale"] + raw["bn2_bias"]
    y = jnp.mean(o, axis=(1, 2))                                      # (N, C)
    hdn = jnp.maximum(jnp.dot(y, raw["fc1"], precision=P), 0.0)
    g = jax.nn.sigmoid(jnp.dot(hdn, raw["fc2"], precision=P))
    o = o * g[:, None, None, :]
    sc = (jnp.einsum("nhwc,co->nhwo", x, raw["wsc"], precision=P)
          * raw["bnsc_scale"] + raw["bnsc_bias"])
    return jnp.maximum(o + sc, 0.0)


# ------------------------------------ main ---------------------------------------
if __name__ == "__main__":
    # BasicBlock(in_planes=4, planes=16, stride=1, dropout_rate=0.0, use_se=True)
    # PyTorch NCHW input (2, 4, 16, 16) <-> NHWC (2, 16, 16, 4) used here.
    N, H, W, IN_PLANES, PLANES = 2, 16, 16, 4, 16

    key = jax.random.PRNGKey(0)
    k_x, k_p = jax.random.split(key)
    x_nhwc = jax.random.normal(k_x, (N, H, W, IN_PLANES), jnp.float32)
    raw = make_params(k_p, IN_PLANES, PLANES)
    packed = pack_params(raw, H, W, use_bf16=False)   # use_bf16=True: faster, looser tol

    out = jax.block_until_ready(basic_block_forward(x_nhwc, packed))
    ref = jax.block_until_ready(basic_block_ref(x_nhwc, raw))

    assert out.shape == (N, H, W, PLANES), out.shape
    err = float(jnp.max(jnp.abs(out - ref)))
    assert err < 2e-3, f"max abs error {err}"
    print("KERNEL_OK")
</pallas_src>

<mosaic_0001>
module attributes {stable_mosaic.version = 11 : i64} {
  func.func @basic_block_kernel(%arg0: i32, %arg1: memref<32x64xf32, #tpu.memory_space<vmem>>, %arg2: memref<64x256xf32, #tpu.memory_space<vmem>>, %arg3: memref<64x512xf32, #tpu.memory_space<vmem>>, %arg4: memref<64x256xf32, #tpu.memory_space<vmem>>, %arg5: memref<1x256xf32, #tpu.memory_space<vmem>>, %arg6: memref<256x256xf32, #tpu.memory_space<vmem>>, %arg7: memref<256x256xf32, #tpu.memory_space<vmem>>, %arg8: memref<256x256xf32, #tpu.memory_space<vmem>>, %arg9: memref<1x256xf32, #tpu.memory_space<vmem>>, %arg10: memref<1x256xf32, #tpu.memory_space<vmem>>, %arg11: memref<16x8xf32, #tpu.memory_space<vmem>>, %arg12: memref<8x16xf32, #tpu.memory_space<vmem>>, %arg13: memref<256x16xf32, #tpu.memory_space<vmem>>, %arg14: memref<16x256xf32, #tpu.memory_space<vmem>>, %arg15: memref<32x256xf32, #tpu.memory_space<vmem>>) attributes {dimension_semantics = [#tpu.dimension_semantics<parallel>], iteration_bounds = array<i64: 1>, scalar_prefetch = 0 : i64, scratch_operands = 0 : i64, tpu.core_type = #tpu.core_type<tc>, window_params = [{transform_indices = @transform_0, window_bounds = array<i64: 32, 64>}, {pipeline_mode = #tpu.pipeline_mode<synchronous>, transform_indices = @transform_1, window_bounds = array<i64: 64, 256>}, {pipeline_mode = #tpu.pipeline_mode<synchronous>, transform_indices = @transform_2, window_bounds = array<i64: 64, 512>}, {pipeline_mode = #tpu.pipeline_mode<synchronous>, transform_indices = @transform_3, window_bounds = array<i64: 64, 256>}, {pipeline_mode = #tpu.pipeline_mode<synchronous>, transform_indices = @transform_4, window_bounds = array<i64: 1, 256>}, {pipeline_mode = #tpu.pipeline_mode<synchronous>, transform_indices = @transform_5, window_bounds = array<i64: 256, 256>}, {pipeline_mode = #tpu.pipeline_mode<synchronous>, transform_indices = @transform_6, window_bounds = array<i64: 256, 256>}, {pipeline_mode = #tpu.pipeline_mode<synchronous>, transform_indices = @transform_7, window_bounds = array<i64: 256, 256>}, {pipeline_mode = #tpu.pipeline_mode<synchronous>, transform_indices = @transform_8, window_bounds = array<i64: 1, 256>}, {pipeline_mode = #tpu.pipeline_mode<synchronous>, transform_indices = @transform_9, window_bounds = array<i64: 1, 256>}, {pipeline_mode = #tpu.pipeline_mode<synchronous>, transform_indices = @transform_10, window_bounds = array<i64: 16, 8>}, {pipeline_mode = #tpu.pipeline_mode<synchronous>, transform_indices = @transform_11, window_bounds = array<i64: 8, 16>}, {pipeline_mode = #tpu.pipeline_mode<synchronous>, transform_indices = @transform_12, window_bounds = array<i64: 256, 16>}, {pipeline_mode = #tpu.pipeline_mode<synchronous>, transform_indices = @transform_13, window_bounds = array<i64: 16, 256>}, {transform_indices = @transform_14, window_bounds = array<i64: 32, 256>}]} {
    %c0 = arith.constant 0 : index
    %c0_0 = arith.constant 0 : index
    %0 = vector.load %arg1[%c0, %c0_0] : memref<32x64xf32, #tpu.memory_space<vmem>>, vector<32x64xf32>
    %1 = tpu.iota {dimensions = array<i32: 0>} : vector<32x1xi32>
    %c16_i32 = arith.constant 16 : i32
    %c0_i32 = arith.constant 0 : i32
    %2 = arith.cmpi eq, %c16_i32, %c0_i32 : i32
    %c1_i32 = arith.constant 1 : i32
    %3 = arith.select %2, %c1_i32, %c16_i32 : i32
    %4 = vector.broadcast %3 : i32 to vector<32x1xi32>
    %5 = arith.remsi %1, %4 : vector<32x1xi32>
    %c0_i32_1 = arith.constant 0 : i32
    %6 = vector.broadcast %c0_i32_1 : i32 to vector<32x1xi32>
    %7 = arith.cmpi ne, %5, %6 : vector<32x1xi32>
    %c0_i32_2 = arith.constant 0 : i32
    %8 = vector.broadcast %c0_i32_2 : i32 to vector<32x1xi32>
    %9 = arith.cmpi slt, %5, %8 : vector<32x1xi32>
    %c0_i32_3 = arith.constant 0 : i32
    %10 = arith.cmpi slt, %3, %c0_i32_3 : i32
    %11 = vector.broadcast %10 : i1 to vector<32x1xi1>
    %12 = vector.broadcast %11 : vector<32x1xi1> to vector<32x1xi1>
    %13 = arith.xori %9, %12 : vector<32x1xi1>
    %14 = arith.andi %13, %7 : vector<32x1xi1>
    %15 = vector.broadcast %3 : i32 to vector<32x1xi32>
    %16 = arith.addi %5, %15 : vector<32x1xi32>
    %17 = arith.select %14, %16, %5 : vector<32x1xi1>, vector<32x1xi32>
    %c0_i32_4 = arith.constant 0 : i32
    %18 = vector.broadcast %c0_i32_4 : i32 to vector<32x1xi32>
    %19 = arith.cmpi eq, %17, %18 : vector<32x1xi32>
    %c16_i32_5 = arith.constant 16 : i32
    %c0_i32_6 = arith.constant 0 : i32
    %20 = arith.cmpi eq, %c16_i32_5, %c0_i32_6 : i32
    %c1_i32_7 = arith.constant 1 : i32
    %21 = arith.select %20, %c1_i32_7, %c16_i32_5 : i32
    %22 = vector.broadcast %21 : i32 to vector<32x1xi32>
    %23 = arith.remsi %1, %22 : vector<32x1xi32>
    %c0_i32_8 = arith.constant 0 : i32
    %24 = vector.broadcast %c0_i32_8 : i32 to vector<32x1xi32>
    %25 = arith.cmpi ne, %23, %24 : vector<32x1xi32>
    %c0_i32_9 = arith.constant 0 : i32
    %26 = vector.broadcast %c0_i32_9 : i32 to vector<32x1xi32>
    %27 = arith.cmpi slt, %23, %26 : vector<32x1xi32>
    %c0_i32_10 = arith.constant 0 : i32
    %28 = arith.cmpi slt, %21, %c0_i32_10 : i32
    %29 = vector.broadcast %28 : i1 to vector<32x1xi1>
    %30 = vector.broadcast %29 : vector<32x1xi1> to vector<32x1xi1>
    %31 = arith.xori %27, %30 : vector<32x1xi1>
    %32 = arith.andi %31, %25 : vector<32x1xi1>
    %33 = vector.broadcast %21 : i32 to vector<32x1xi32>
    %34 = arith.addi %23, %33 : vector<32x1xi32>
    %35 = arith.select %32, %34, %23 : vector<32x1xi1>, vector<32x1xi32>
    %c15_i32 = arith.constant 15 : i32
    %36 = vector.broadcast %c15_i32 : i32 to vector<32x1xi32>
    %37 = arith.cmpi eq, %35, %36 : vector<32x1xi32>
    %c0_11 = arith.constant 0 : index
    %c0_12 = arith.constant 0 : index
    %38 = vector.load %arg3[%c0_11, %c0_12] : memref<64x512xf32, #tpu.memory_space<vmem>>, vector<64x512xf32>
    %cst = arith.constant dense<0.000000e+00> : vector<32x512xf32>
    %39 = tpu.matmul %0, %38, %cst {dimension_numbers = #tpu.dot_dimension_numbers<[1], [0], [0], [1], [0, 0, 1, 1], [], []>} : vector<32x64xf32>, vector<64x512xf32>, vector<32x512xf32> -> vector<32x512xf32>
    %40 = vector.extract_strided_slice %39 {offsets = [0, 0], sizes = [32, 256], strides = [1, 1]} : vector<32x512xf32> to vector<32x256xf32>
    %41 = vector.extract_strided_slice %39 {offsets = [0, 256], sizes = [32, 256], strides = [1, 1]} : vector<32x512xf32> to vector<32x256xf32>
    %c0_13 = arith.constant 0 : index
    %c0_14 = arith.constant 0 : index
    %42 = vector.load %arg10[%c0_13, %c0_14] : memref<1x256xf32, #tpu.memory_space<vmem>>, vector<1x256xf32>
    %43 = vector.broadcast %42 : vector<1x256xf32> to vector<32x256xf32>
    %44 = arith.addf %41, %43 : vector<32x256xf32>
    %c1_i32_15 = arith.constant 1 : i32
    %45 = tpu.dynamic_rotate %0 by %c1_i32_15 dim 0 : vector<32x64xf32>, i32 -> vector<32x64xf32>
    %cst_16 = arith.constant 0.000000e+00 : f32
    %46 = vector.shape_cast %19 : vector<32x1xi1> to vector<32x1xi1>
    %47 = vector.broadcast %46 : vector<32x1xi1> to vector<32x64xi1>
    %48 = vector.broadcast %cst_16 : f32 to vector<32x64xf32>
    %49 = arith.select %47, %48, %45 : vector<32x64xi1>, vector<32x64xf32>
    %c0_17 = arith.constant 0 : index
    %c0_18 = arith.constant 0 : index
    %50 = vector.load %arg2[%c0_17, %c0_18] : memref<64x256xf32, #tpu.memory_space<vmem>>, vector<64x256xf32>
    %cst_19 = arith.constant dense<0.000000e+00> : vector<32x256xf32>
    %51 = tpu.matmul %49, %50, %cst_19 {dimension_numbers = #tpu.dot_dimension_numbers<[1], [0], [0], [1], [0, 0, 1, 1], [], []>} : vector<32x64xf32>, vector<64x256xf32>, vector<32x256xf32> -> vector<32x256xf32>
    %52 = arith.addf %40, %51 : vector<32x256xf32>
    %c31_i32 = arith.constant 31 : i32
    %53 = tpu.dynamic_rotate %0 by %c31_i32 dim 0 : vector<32x64xf32>, i32 -> vector<32x64xf32>
    %cst_20 = arith.constant 0.000000e+00 : f32
    %54 = vector.shape_cast %37 : vector<32x1xi1> to vector<32x1xi1>
    %55 = vector.broadcast %54 : vector<32x1xi1> to vector<32x64xi1>
    %56 = vector.broadcast %cst_20 : f32 to vector<32x64xf32>
    %57 = arith.select %55, %56, %53 : vector<32x64xi1>, vector<32x64xf32>
    %c0_21 = arith.constant 0 : index
    %c0_22 = arith.constant 0 : index
    %58 = vector.load %arg4[%c0_21, %c0_22] : memref<64x256xf32, #tpu.memory_space<vmem>>, vector<64x256xf32>
    %cst_23 = arith.constant dense<0.000000e+00> : vector<32x256xf32>
    %59 = tpu.matmul %57, %58, %cst_23 {dimension_numbers = #tpu.dot_dimension_numbers<[1], [0], [0], [1], [0, 0, 1, 1], [], []>} : vector<32x64xf32>, vector<64x256xf32>, vector<32x256xf32> -> vector<32x256xf32>
    %60 = arith.addf %52, %59 : vector<32x256xf32>
    %c0_24 = arith.constant 0 : index
    %c0_25 = arith.constant 0 : index
    %61 = vector.load %arg5[%c0_24, %c0_25] : memref<1x256xf32, #tpu.memory_space<vmem>>, vector<1x256xf32>
    %62 = vector.broadcast %61 : vector<1x256xf32> to vector<32x256xf32>
    %63 = arith.addf %60, %62 : vector<32x256xf32>
    %cst_26 = arith.constant 0.000000e+00 : f32
    %64 = vector.broadcast %cst_26 : f32 to vector<32x256xf32>
    %65 = arith.maximumf %63, %64 : vector<32x256xf32>
    %c0_27 = arith.constant 0 : index
    %c0_28 = arith.constant 0 : index
    %66 = vector.load %arg7[%c0_27, %c0_28] : memref<256x256xf32, #tpu.memory_space<vmem>>, vector<256x256xf32>
    %cst_29 = arith.constant dense<0.000000e+00> : vector<32x256xf32>
    %67 = tpu.matmul %65, %66, %cst_29 {dimension_numbers = #tpu.dot_dimension_numbers<[1], [0], [0], [1], [0, 0, 1, 1], [], []>} : vector<32x256xf32>, vector<256x256xf32>, vector<32x256xf32> -> vector<32x256xf32>
    %c1_i32_30 = arith.constant 1 : i32
    %68 = tpu.dynamic_rotate %65 by %c1_i32_30 dim 0 : vector<32x256xf32>, i32 -> vector<32x256xf32>
    %cst_31 = arith.constant 0.000000e+00 : f32
    %69 = vector.shape_cast %19 : vector<32x1xi1> to vector<32x1xi1>
    %70 = vector.broadcast %69 : vector<32x1xi1> to vector<32x256xi1>
    %71 = vector.broadcast %cst_31 : f32 to vector<32x256xf32>
    %72 = arith.select %70, %71, %68 : vector<32x256xi1>, vector<32x256xf32>
    %c0_32 = arith.constant 0 : index
    %c0_33 = arith.constant 0 : index
    %73 = vector.load %arg6[%c0_32, %c0_33] : memref<256x256xf32, #tpu.memory_space<vmem>>, vector<256x256xf32>
    %cst_34 = arith.constant dense<0.000000e+00> : vector<32x256xf32>
    %74 = tpu.matmul %72, %73, %cst_34 {dimension_numbers = #tpu.dot_dimension_numbers<[1], [0], [0], [1], [0, 0, 1, 1], [], []>} : vector<32x256xf32>, vector<256x256xf32>, vector<32x256xf32> -> vector<32x256xf32>
    %75 = arith.addf %67, %74 : vector<32x256xf32>
    %c31_i32_35 = arith.constant 31 : i32
    %76 = tpu.dynamic_rotate %65 by %c31_i32_35 dim 0 : vector<32x256xf32>, i32 -> vector<32x256xf32>
    %cst_36 = arith.constant 0.000000e+00 : f32
    %77 = vector.shape_cast %37 : vector<32x1xi1> to vector<32x1xi1>
    %78 = vector.broadcast %77 : vector<32x1xi1> to vector<32x256xi1>
    %79 = vector.broadcast %cst_36 : f32 to vector<32x256xf32>
    %80 = arith.select %78, %79, %76 : vector<32x256xi1>, vector<32x256xf32>
    %c0_37 = arith.constant 0 : index
    %c0_38 = arith.constant 0 : index
    %81 = vector.load %arg8[%c0_37, %c0_38] : memref<256x256xf32, #tpu.memory_space<vmem>>, vector<256x256xf32>
    %cst_39 = arith.constant dense<0.000000e+00> : vector<32x256xf32>
    %82 = tpu.matmul %80, %81, %cst_39 {dimension_numbers = #tpu.dot_dimension_numbers<[1], [0], [0], [1], [0, 0, 1, 1], [], []>} : vector<32x256xf32>, vector<256x256xf32>, vector<32x256xf32> -> vector<32x256xf32>
    %83 = arith.addf %75, %82 : vector<32x256xf32>
    %c0_40 = arith.constant 0 : index
    %c0_41 = arith.constant 0 : index
    %84 = vector.load %arg9[%c0_40, %c0_41] : memref<1x256xf32, #tpu.memory_space<vmem>>, vector<1x256xf32>
    %85 = vector.broadcast %84 : vector<1x256xf32> to vector<32x256xf32>
    %86 = arith.addf %83, %85 : vector<32x256xf32>
    %87 = vector.shape_cast %86 : vector<32x256xf32> to vector<2x16x256xf32>
    %cst_42 = arith.constant dense<0.000000e+00> : vector<2x256xf32>
    %88 = vector.multi_reduction <add>, %87, %cst_42 [1] : vector<2x16x256xf32> to vector<2x256xf32>
    %cst_43 = arith.constant 3.906250e-03 : f32
    %89 = vector.broadcast %cst_43 : f32 to vector<2x256xf32>
    %90 = arith.mulf %88, %89 : vector<2x256xf32>
    %c0_44 = arith.constant 0 : index
    %c0_45 = arith.constant 0 : index
    %91 = vector.load %arg13[%c0_44, %c0_45] : memref<256x16xf32, #tpu.memory_space<vmem>>, vector<256x16xf32>
    %cst_46 = arith.constant dense<0.000000e+00> : vector<2x16xf32>
    %92 = tpu.matmul %90, %91, %cst_46 {dimension_numbers = #tpu.dot_dimension_numbers<[1], [0], [0], [1], [0, 0, 1, 1], [], []>} : vector<2x256xf32>, vector<256x16xf32>, vector<2x16xf32> -> vector<2x16xf32>
    %c0_47 = arith.constant 0 : index
    %c0_48 = arith.constant 0 : index
    %93 = vector.load %arg11[%c0_47, %c0_48] : memref<16x8xf32, #tpu.memory_space<vmem>>, vector<16x8xf32>
    %cst_49 = arith.constant dense<0.000000e+00> : vector<2x8xf32>
    %94 = tpu.matmul %92, %93, %cst_49 {dimension_numbers = #tpu.dot_dimension_numbers<[1], [0], [0], [1], [0, 0, 1, 1], [], []>} : vector<2x16xf32>, vector<16x8xf32>, vector<2x8xf32> -> vector<2x8xf32>
    %cst_50 = arith.constant 0.000000e+00 : f32
    %95 = vector.broadcast %cst_50 : f32 to vector<2x8xf32>
    %96 = arith.maximumf %94, %95 : vector<2x8xf32>
    %c0_51 = arith.constant 0 : index
    %c0_52 = arith.constant 0 : index
    %97 = vector.load %arg12[%c0_51, %c0_52] : memref<8x16xf32, #tpu.memory_space<vmem>>, vector<8x16xf32>
    %cst_53 = arith.constant dense<0.000000e+00> : vector<2x16xf32>
    %98 = tpu.matmul %96, %97, %cst_53 {dimension_numbers = #tpu.dot_dimension_numbers<[1], [0], [0], [1], [0, 0, 1, 1], [], []>} : vector<2x8xf32>, vector<8x16xf32>, vector<2x16xf32> -> vector<2x16xf32>
    %99 = arith.negf %98 : vector<2x16xf32>
    %100 = math.exp %99 : vector<2x16xf32>
    %cst_54 = arith.constant 1.000000e+00 : f32
    %101 = vector.broadcast %cst_54 : f32 to vector<2x16xf32>
    %102 = arith.addf %101, %100 : vector<2x16xf32>
    %103 = arith.divf %101, %102 : vector<2x16xf32>
    %c0_55 = arith.constant 0 : index
    %c0_56 = arith.constant 0 : index
    %104 = vector.load %arg14[%c0_55, %c0_56] : memref<16x256xf32, #tpu.memory_space<vmem>>, vector<16x256xf32>
    %cst_57 = arith.constant dense<0.000000e+00> : vector<2x256xf32>
    %105 = tpu.matmul %103, %104, %cst_57 {dimension_numbers = #tpu.dot_dimension_numbers<[1], [0], [0], [1], [0, 0, 1, 1], [], []>} : vector<2x16xf32>, vector<16x256xf32>, vector<2x256xf32> -> vector<2x256xf32>
    %106 = vector.shape_cast %105 : vector<2x256xf32> to vector<2x1x256xf32>
    %107 = vector.broadcast %106 : vector<2x1x256xf32> to vector<2x16x256xf32>
    %108 = arith.mulf %87, %107 : vector<2x16x256xf32>
    %109 = vector.shape_cast %108 : vector<2x16x256xf32> to vector<32x256xf32>
    %110 = arith.addf %109, %44 : vector<32x256xf32>
    %cst_58 = arith.constant 0.000000e+00 : f32
    %111 = vector.broadcast %cst_58 : f32 to vector<32x256xf32>
    %112 = arith.maximumf %110, %111 : vector<32x256xf32>
    %c0_59 = arith.constant 0 : index
    %c0_60 = arith.constant 0 : index
    %113 = vector.load %arg15[%c0_59, %c0_60] : memref<32x256xf32, #tpu.memory_space<vmem>>, vector<32x256xf32>
    tpu.vector_store %arg15[%c0_59, %c0_60], %112 {strides = array<i32>} : memref<32x256xf32, #tpu.memory_space<vmem>>, vector<32x256xf32>,
    return
  }
  func.func @transform_0(%arg0: i32) -> (i32, i32) {
    %c0_i32 = arith.constant 0 : i32
    %c0_i32_0 = arith.constant 0 : i32
    return %arg0, %c0_i32 : i32, i32
  }
  func.func @transform_1(%arg0: i32) -> (i32, i32) {
    %c0_i32 = arith.constant 0 : i32
    %c0_i32_0 = arith.constant 0 : i32
    %c0_i32_1 = arith.constant 0 : i32
    return %c0_i32, %c0_i32_0 : i32, i32
  }
  func.func @transform_2(%arg0: i32) -> (i32, i32) {
    %c0_i32 = arith.constant 0 : i32
    %c0_i32_0 = arith.constant 0 : i32
    %c0_i32_1 = arith.constant 0 : i32
    return %c0_i32, %c0_i32_0 : i32, i32
  }
  func.func @transform_3(%arg0: i32) -> (i32, i32) {
    %c0_i32 = arith.constant 0 : i32
    %c0_i32_0 = arith.constant 0 : i32
    %c0_i32_1 = arith.constant 0 : i32
    return %c0_i32, %c0_i32_0 : i32, i32
  }
  func.func @transform_4(%arg0: i32) -> (i32, i32) {
    %c0_i32 = arith.constant 0 : i32
    %c0_i32_0 = arith.constant 0 : i32
    %c0_i32_1 = arith.constant 0 : i32
    return %c0_i32, %c0_i32_0 : i32, i32
  }
  func.func @transform_5(%arg0: i32) -> (i32, i32) {
    %c0_i32 = arith.constant 0 : i32
    %c0_i32_0 = arith.constant 0 : i32
    %c0_i32_1 = arith.constant 0 : i32
    return %c0_i32, %c0_i32_0 : i32, i32
  }
  func.func @transform_6(%arg0: i32) -> (i32, i32) {
    %c0_i32 = arith.constant 0 : i32
    %c0_i32_0 = arith.constant 0 : i32
    %c0_i32_1 = arith.constant 0 : i32
    return %c0_i32, %c0_i32_0 : i32, i32
  }
  func.func @transform_7(%arg0: i32) -> (i32, i32) {
    %c0_i32 = arith.constant 0 : i32
    %c0_i32_0 = arith.constant 0 : i32
    %c0_i32_1 = arith.constant 0 : i32
    return %c0_i32, %c0_i32_0 : i32, i32
  }
  func.func @transform_8(%arg0: i32) -> (i32, i32) {
    %c0_i32 = arith.constant 0 : i32
    %c0_i32_0 = arith.constant 0 : i32
    %c0_i32_1 = arith.constant 0 : i32
    return %c0_i32, %c0_i32_0 : i32, i32
  }
  func.func @transform_9(%arg0: i32) -> (i32, i32) {
    %c0_i32 = arith.constant 0 : i32
    %c0_i32_0 = arith.constant 0 : i32
    %c0_i32_1 = arith.constant 0 : i32
    return %c0_i32, %c0_i32_0 : i32, i32
  }
  func.func @transform_10(%arg0: i32) -> (i32, i32) {
    %c0_i32 = arith.constant 0 : i32
    %c0_i32_0 = arith.constant 0 : i32
    %c0_i32_1 = arith.constant 0 : i32
    return %c0_i32, %c0_i32_0 : i32, i32
  }
  func.func @transform_11(%arg0: i32) -> (i32, i32) {
    %c0_i32 = arith.constant 0 : i32
    %c0_i32_0 = arith.constant 0 : i32
    %c0_i32_1 = arith.constant 0 : i32
    return %c0_i32, %c0_i32_0 : i32, i32
  }
  func.func @transform_12(%arg0: i32) -> (i32, i32) {
    %c0_i32 = arith.constant 0 : i32
    %c0_i32_0 = arith.constant 0 : i32
    %c0_i32_1 = arith.constant 0 : i32
    return %c0_i32, %c0_i32_0 : i32, i32
  }
  func.func @transform_13(%arg0: i32) -> (i32, i32) {
    %c0_i32 = arith.constant 0 : i32
    %c0_i32_0 = arith.constant 0 : i32
    %c0_i32_1 = arith.constant 0 : i32
    return %c0_i32, %c0_i32_0 : i32, i32
  }
  func.func @transform_14(%arg0: i32) -> (i32, i32) {
    %c0_i32 = arith.constant 0 : i32
    %c0_i32_0 = arith.constant 0 : i32
    return %arg0, %c0_i32 : i32, i32
  }
}

</mosaic_0001>

<llo_original>
// kernel: tpu_custom_call.1
$region0: #{tpu_custom_call.1}
  #allocation0 [shape = 'u32[]', space=smem, size = 0x4, offset = 0x4, fixed_abs, tag = 'smem constant byte address 0x4 - core index']
  #allocation1 [shape = 'u32[72,128]{1,0:T(1,128)}', space=vmem, size = 0x9000, scoped, tag = 'internal scratch']
  %s0 = inlined_call_operand.vmem [shape: f32[32,64], index: 0, kind: input, shape index: {}]
  %s1 = inlined_call_operand.hbm [shape: f32[64,256], index: 1, kind: input, shape index: {}]
  %s2 = inlined_call_operand.vmem [shape: f32[64,512], index: 2, kind: input, shape index: {}]
  %s3 = inlined_call_operand.hbm [shape: f32[64,256], index: 3, kind: input, shape index: {}]
  %s4 = inlined_call_operand.vmem [shape: f32[1,256], index: 4, kind: input, shape index: {}]
  %s5 = inlined_call_operand.hbm [shape: f32[256,256], index: 5, kind: input, shape index: {}]
  %s6 = inlined_call_operand.hbm [shape: f32[256,256], index: 6, kind: input, shape index: {}]
  %s7 = inlined_call_operand.hbm [shape: f32[256,256], index: 7, kind: input, shape index: {}]
  %s8 = inlined_call_operand.hbm [shape: f32[1,256], index: 8, kind: input, shape index: {}]
  %s9 = inlined_call_operand.hbm [shape: f32[1,256], index: 9, kind: input, shape index: {}]
  %s10 = inlined_call_operand.vmem [shape: f32[16,8], index: 10, kind: input, shape index: {}]
  %s11 = inlined_call_operand.hbm [shape: f32[8,16], index: 11, kind: input, shape index: {}]
  %s12 = inlined_call_operand.vmem [shape: f32[256,16], index: 12, kind: input, shape index: {}]
  %s13 = inlined_call_operand.hbm [shape: f32[16,256], index: 13, kind: input, shape index: {}]
  %s14 = inlined_call_operand.hbm [shape: f32[32,256], index: 14, kind: output, shape index: {}]
  %s15 = sld [smem:[#allocation0]]
  $region102: #{tpu_custom_call.1} parent=0
    _
  %s17 = ssub.s32 1, %s15
  %s18 = scalar_select 0, %s17, %s15
  $region1: #{tpu_custom_call.1} parent=0
    #allocation2 [shape = 'u8[65536]{0}', space=vmem, size = 0x10000, scoped, tag = 'input window, operand 1, single buffered']
    #allocation3 [shape = 's32[1]{0}', space=sflag, size = 0x4, scoped, tag = 'scoped memory for tpu_custom_call.1']
    #allocation4 [shape = 's32[1]{0}', space=sflag, size = 0x4, scoped, tag = 'scoped memory for tpu_custom_call.1']
    #allocation5 [shape = 'u8[65536]{0}', space=vmem, size = 0x10000, scoped, tag = 'input window, operand 3, single buffered']
    #allocation6 [shape = 's32[1]{0}', space=sflag, size = 0x4, scoped, tag = 'scoped memory for tpu_custom_call.1']
    #allocation7 [shape = 'u8[262144]{0}', space=vmem, size = 0x40000, scoped, tag = 'input window, operand 5, single buffered']
    #allocation8 [shape = 'u8[262144]{0}', space=vmem, size = 0x40000, scoped, tag = 'input window, operand 6, single buffered']
    #allocation9 [shape = 's32[1]{0}', space=sflag, size = 0x4, scoped, tag = 'scoped memory for tpu_custom_call.1']
    #allocation10 [shape = 'u8[262144]{0}', space=vmem, size = 0x40000, scoped, tag = 'input window, operand 7, single buffered']
    #allocation11 [shape = 'u8[1024]{0}', space=vmem, size = 0x400, scoped, tag = 'input window, operand 8, single buffered']
    #allocation12 [shape = 's32[1]{0}', space=sflag, size = 0x4, scoped, tag = 'scoped memory for tpu_custom_call.1']
    #allocation13 [shape = 'u8[1024]{0}', space=vmem, size = 0x400, scoped, tag = 'input window, operand 9, single buffered']
    #allocation14 [shape = 'u8[4096]{0}', space=vmem, size = 0x1000, scoped, tag = 'input window, operand 11, single buffered']
    #allocation15 [shape = 's32[1]{0}', space=sflag, size = 0x4, scoped, tag = 'scoped memory for tpu_custom_call.1']
    #allocation16 [shape = 'u8[16384]{0}', space=vmem, size = 0x4000, scoped, tag = 'input window, operand 13, single buffered']
    #allocation17 [shape = 'u8[32768]{0}', space=vmem, size = 0x8000, scoped, tag = 'output window, operand 0, single buffered']
    %19 = vsyncpa [#allocation3], 0
    %20 = vsyncpa [#allocation6], 0
    %21 = vsyncpa [#allocation9], 0
    %22 = vsyncpa [#allocation12], 0
    %23 = vsyncpa [#allocation15], 0
    %24 = vsyncpa [#allocation4], 0
    // Predicated region
    $region2: #{tpu_custom_call.1} parent=1 // pred_check
      _
    $region3: #{tpu_custom_call.1} parent=1 // pred_check_branch
      %26 = sbr.rel (0) target = $region5
    $region4: #{tpu_custom_call.1} parent=1 // pred_region
      _
    $region5: #{tpu_custom_call.1} parent=1 // pred_fallthru
      _
    // Predicated region
    $region6: #{tpu_custom_call.1} parent=1 // pred_check
      _
    $region7: #{tpu_custom_call.1} parent=1 // pred_check_branch
      %28 = sbr.rel (0) target = $region9
    $region8: #{tpu_custom_call.1} parent=1 // pred_region
      %30 = vsyncadd [#allocation3], 0
      %s31 = sshll.u32 %s1, 4
      %s32 = int_to_ptr.hbm [resolvable:$true] %s31
      %s33 = sshll.u32 [#allocation2], 4
      %s34 = int_to_ptr.vmem [resolvable:$true] %s33
      %39 = dma.hbm_to_vmem [thread:$0]  %s32, 2048, %s34, [#allocation3], 256, 256, 16
    $region9: #{tpu_custom_call.1} parent=1 // pred_fallthru
      _
    // Predicated region
    $region10: #{tpu_custom_call.1} parent=1 // pred_check
      _
    $region11: #{tpu_custom_call.1} parent=1 // pred_check_branch
      %41 = sbr.rel (0) target = $region13
    $region12: #{tpu_custom_call.1} parent=1 // pred_region
      _
    $region13: #{tpu_custom_call.1} parent=1 // pred_fallthru
      _
    // Predicated region
    $region14: #{tpu_custom_call.1} parent=1 // pred_check
      _
    $region15: #{tpu_custom_call.1} parent=1 // pred_check_branch
      %43 = sbr.rel (0) target = $region17
    $region16: #{tpu_custom_call.1} parent=1 // pred_region
      %45 = vsyncadd [#allocation6], 0
      %s46 = sshll.u32 %s3, 4
      %s47 = int_to_ptr.hbm [resolvable:$true] %s46
      %s48 = sshll.u32 [#allocation5], 4
      %s49 = int_to_ptr.vmem [resolvable:$true] %s48
      %54 = dma.hbm_to_vmem [thread:$0]  %s47, 2048, %s49, [#allocation6], 256, 256, 16
    $region17: #{tpu_custom_call.1} parent=1 // pred_fallthru
      _
    // Predicated region
    $region18: #{tpu_custom_call.1} parent=1 // pred_check
      _
    $region19: #{tpu_custom_call.1} parent=1 // pred_check_branch
      %56 = sbr.rel (0) target = $region21
    $region20: #{tpu_custom_call.1} parent=1 // pred_region
      _
    $region21: #{tpu_custom_call.1} parent=1 // pred_fallthru
      _
    // Predicated region
    $region22: #{tpu_custom_call.1} parent=1 // pred_check
      _
    $region23: #{tpu_custom_call.1} parent=1 // pred_check_branch
      %58 = sbr.rel (0) target = $region25
    $region24: #{tpu_custom_call.1} parent=1 // pred_region
      %60 = vsyncadd [#allocation6], 0
      %s61 = sshll.u32 %s5, 4
      %s62 = int_to_ptr.hbm [resolvable:$true] %s61
      %s63 = sshll.u32 [#allocation7], 4
      %s64 = int_to_ptr.vmem [resolvable:$true] %s63
      %69 = dma.hbm_to_vmem [thread:$0]  %s62, 8192, %s64, [#allocation6], 256, 256, 16
    $region25: #{tpu_custom_call.1} parent=1 // pred_fallthru
      _
    // Predicated region
    $region26: #{tpu_custom_call.1} parent=1 // pred_check
      _
    $region27: #{tpu_custom_call.1} parent=1 // pred_check_branch
      %71 = sbr.rel (0) target = $region29
    $region28: #{tpu_custom_call.1} parent=1 // pred_region
      %73 = vsyncadd [#allocation9], 0
      %s74 = sshll.u32 %s6, 4
      %s75 = int_to_ptr.hbm [resolvable:$true] %s74
      %s76 = sshll.u32 [#allocation8], 4
      %s77 = int_to_ptr.vmem [resolvable:$true] %s76
      %82 = dma.hbm_to_vmem [thread:$0]  %s75, 8192, %s77, [#allocation9], 256, 256, 16
    $region29: #{tpu_custom_call.1} parent=1 // pred_fallthru
      _
    // Predicated region
    $region30: #{tpu_custom_call.1} parent=1 // pred_check
      _
    $region31: #{tpu_custom_call.1} parent=1 // pred_check_branch
      %84 = sbr.rel (0) target = $region33
    $region32: #{tpu_custom_call.1} parent=1 // pred_region
      %86 = vsyncadd [#allocation9], 0
      %s87 = sshll.u32 %s7, 4
      %s88 = int_to_ptr.hbm [resolvable:$true] %s87
      %s89 = sshll.u32 [#allocation10], 4
      %s90 = int_to_ptr.vmem [resolvable:$true] %s89
      %95 = dma.hbm_to_vmem [thread:$0]  %s88, 8192, %s90, [#allocation9], 256, 256, 16
    $region33: #{tpu_custom_call.1} parent=1 // pred_fallthru
      _
    // Predicated region
    $region34: #{tpu_custom_call.1} parent=1 // pred_check
      _
    $region35: #{tpu_custom_call.1} parent=1 // pred_check_branch
      %97 = sbr.rel (0) target = $region37
    $region36: #{tpu_custom_call.1} parent=1 // pred_region
      %99 = vsyncadd [#allocation12], 0
      %s101 = sshll.u32 %s8, 4
      %s102 = int_to_ptr.hbm [resolvable:$true] %s101
      %s103 = sshll.u32 [#allocation11], 4
      %s104 = int_to_ptr.vmem [resolvable:$true] %s103
      %106 = dma.hbm_to_vmem [thread:$0]  %s102, 32, %s104, [#allocation12]
    $region37: #{tpu_custom_call.1} parent=1 // pred_fallthru
      _
    // Predicated region
    $region38: #{tpu_custom_call.1} parent=1 // pred_check
      _
    $region39: #{tpu_custom_call.1} parent=1 // pred_check_branch
      %108 = sbr.rel (0) target = $region41
    $region40: #{tpu_custom_call.1} parent=1 // pred_region
      %110 = vsyncadd [#allocation12], 0
      %s112 = sshll.u32 %s9, 4
      %s113 = int_to_ptr.hbm [resolvable:$true] %s112
      %s114 = sshll.u32 [#allocation13], 4
      %s115 = int_to_ptr.vmem [resolvable:$true] %s114
      %117 = dma.hbm_to_vmem [thread:$0]  %s113, 32, %s115, [#allocation12]
    $region41: #{tpu_custom_call.1} parent=1 // pred_fallthru
      _
    // Predicated region
    $region42: #{tpu_custom_call.1} parent=1 // pred_check
      _
    $region43: #{tpu_custom_call.1} parent=1 // pred_check_branch
      %119 = sbr.rel (0) target = $region45
    $region44: #{tpu_custom_call.1} parent=1 // pred_region
      _
    $region45: #{tpu_custom_call.1} parent=1 // pred_fallthru
      _
    // Predicated region
    $region46: #{tpu_custom_call.1} parent=1 // pred_check
      _
    $region47: #{tpu_custom_call.1} parent=1 // pred_check_branch
      %121 = sbr.rel (0) target = $region49
    $region48: #{tpu_custom_call.1} parent=1 // pred_region
      %123 = vsyncadd [#allocation15], 0
      %s125 = sshll.u32 %s11, 4
      %s126 = int_to_ptr.hbm [resolvable:$true] %s125
      %s127 = sshll.u32 [#allocation14], 4
      %s128 = int_to_ptr.vmem [resolvable:$true] %s127
      %130 = dma.hbm_to_vmem [thread:$0]  %s126, 128, %s128, [#allocation15]
    $region49: #{tpu_custom_call.1} parent=1 // pred_fallthru
      _
    // Predicated region
    $region50: #{tpu_custom_call.1} parent=1 // pred_check
      _
    $region51: #{tpu_custom_call.1} parent=1 // pred_check_branch
      %132 = sbr.rel (0) target = $region53
    $region52: #{tpu_custom_call.1} parent=1 // pred_region
      _
    $region53: #{tpu_custom_call.1} parent=1 // pred_fallthru
      _
    // Predicated region
    $region54: #{tpu_custom_call.1} parent=1 // pred_check
      _
    $region55: #{tpu_custom_call.1} parent=1 // pred_check_branch
      %134 = sbr.rel (0) target = $region57
    $region56: #{tpu_custom_call.1} parent=1 // pred_region
      %136 = vsyncadd [#allocation15], 0
      %s137 = sshll.u32 %s13, 4
      %s138 = int_to_ptr.hbm [resolvable:$true] %s137
      %s139 = sshll.u32 [#allocation16], 4
      %s140 = int_to_ptr.vmem [resolvable:$true] %s139
      %145 = dma.hbm_to_vmem [thread:$0]  %s138, 512, %s140, [#allocation15], 256, 256, 16
    $region57: #{tpu_custom_call.1} parent=1 // pred_fallthru
      _
    // Predicated region
    $region58: #{tpu_custom_call.1} parent=1 // pred_check
      _
    $region59: #{tpu_custom_call.1} parent=1 // pred_check_branch
      %147 = sbr.rel (0) target = $region61
    $region60: #{tpu_custom_call.1} parent=1 // pred_region
      %149 = dma.done [#allocation3], 2048
    $region61: #{tpu_custom_call.1} parent=1 // pred_fallthru
      _
    // Predicated region
    $region62: #{tpu_custom_call.1} parent=1 // pred_check
      _
    $region63: #{tpu_custom_call.1} parent=1 // pred_check_branch
      %151 = sbr.rel (0) target = $region65
    $region64: #{tpu_custom_call.1} parent=1 // pred_region
      %153 = dma.done [#allocation6], 2048
    $region65: #{tpu_custom_call.1} parent=1 // pred_fallthru
      _
    // Predicated region
    $region66: #{tpu_custom_call.1} parent=1 // pred_check
      _
    $region67: #{tpu_custom_call.1} parent=1 // pred_check_branch
      %155 = sbr.rel (0) target = $region69
    $region68: #{tpu_custom_call.1} parent=1 // pred_region
      %157 = dma.done [#allocation6], 8192
    $region69: #{tpu_custom_call.1} parent=1 // pred_fallthru
      _
    // Predicated region
    $region70: #{tpu_custom_call.1} parent=1 // pred_check
      _
    $region71: #{tpu_custom_call.1} parent=1 // pred_check_branch
      %159 = sbr.rel (0) target = $region73
    $region72: #{tpu_custom_call.1} parent=1 // pred_region
      %161 = dma.done [#allocation9], 8192
    $region73: #{tpu_custom_call.1} parent=1 // pred_fallthru
      _
    // Predicated region
    $region74: #{tpu_custom_call.1} parent=1 // pred_check
      _
    $region75: #{tpu_custom_call.1} parent=1 // pred_check_branch
      %163 = sbr.rel (0) target = $region77
    $region76: #{tpu_custom_call.1} parent=1 // pred_region
      %165 = dma.done [#allocation9], 8192
    $region77: #{tpu_custom_call.1} parent=1 // pred_fallthru
      _
    // Predicated region
    $region78: #{tpu_custom_call.1} parent=1 // pred_check
      _
    $region79: #{tpu_custom_call.1} parent=1 // pred_check_branch
      %167 = sbr.rel (0) target = $region81
    $region80: #{tpu_custom_call.1} parent=1 // pred_region
      %169 = dma.done [#allocation12], 32
    $region81: #{tpu_custom_call.1} parent=1 // pred_fallthru
      _
    // Predicated region
    $region82: #{tpu_custom_call.1} parent=1 // pred_check
      _
    $region83: #{tpu_custom_call.1} parent=1 // pred_check_branch
      %171 = sbr.rel (0) target = $region85
    $region84: #{tpu_custom_call.1} parent=1 // pred_region
      %173 = dma.done [#allocation12], 32
    $region85: #{tpu_custom_call.1} parent=1 // pred_fallthru
      _
    // Predicated region
    $region86: #{tpu_custom_call.1} parent=1 // pred_check
      _
    $region87: #{tpu_custom_call.1} parent=1 // pred_check_branch
      %175 = sbr.rel (0) target = $region89
    $region88: #{tpu_custom_call.1} parent=1 // pred_region
      %177 = dma.done [#allocation15], 128
    $region89: #{tpu_custom_call.1} parent=1 // pred_fallthru
      _
    // Predicated region
    $region90: #{tpu_custom_call.1} parent=1 // pred_check
      _
    $region91: #{tpu_custom_call.1} parent=1 // pred_check_branch
      %179 = sbr.rel (0) target = $region93
    $region92: #{tpu_custom_call.1} parent=1 // pred_region
      %181 = dma.done [#allocation15], 512
    $region93: #{tpu_custom_call.1} parent=1 // pred_fallthru
      _
    %v182 = vld [vmem:[%s0] sm:$0xff]
    %v183 = vld [vmem:[%s0 + $0x8] sm:$0xff]
    %v184 = vld [vmem:[%s0 + $0x10] sm:$0xff]
    %v185 = vld [vmem:[%s0 + $0x18] sm:$0xff]
    %v186 = vlaneseq
    %v187 = vshrl.u32 %v186, 7
    %v188 = vadd.s32 %v187, 8
    %v189 = vadd.s32 %v187, 16
    %v190 = vadd.s32 %v187, 24
    %vm191 = vcmp.lt.s32.totalorder %v187, 0
    %v192 = vsub.s32 0, %v187
    %v193 = vsel %vm191, %v192, %v187
    %v194 = vshrl.u32 %v193, 4
    %v195 = vand.u32 %v193, 15
    %v196 = vsub.s32 0, %v195
    %v197 = vsel %vm191, %v196, %v195
    %vm198 = vcmp.lt.s32.totalorder %v188, 0
    %v199 = vsub.s32 0, %v188
    %v200 = vsel %vm198, %v199, %v188
    %v201 = vshrl.u32 %v200, 4
    %v202 = vand.u32 %v200, 15
    %v203 = vsub.s32 0, %v202
    %v204 = vsel %vm198, %v203, %v202
    %vm205 = vcmp.lt.s32.totalorder %v189, 0
    %v206 = vsub.s32 0, %v189
    %v207 = vsel %vm205, %v206, %v189
    %v208 = vshrl.u32 %v207, 4
    %v209 = vand.u32 %v207, 15
    %v210 = vsub.s32 0, %v209
    %v211 = vsel %vm205, %v210, %v209
    %vm212 = vcmp.lt.s32.totalorder %v190, 0
    %v213 = vsub.s32 0, %v190
    %v214 = vsel %vm212, %v213, %v190
    %v215 = vshrl.u32 %v214, 4
    %v216 = vand.u32 %v214, 15
    %v217 = vsub.s32 0, %v216
    %v218 = vsel %vm212, %v217, %v216
    %vm219 = vcmp.ne.s32.totalorder %v197, 0
    %vm220 = vcmp.ne.s32.totalorder %v204, 0
    %vm221 = vcmp.ne.s32.totalorder %v211, 0
    %vm222 = vcmp.ne.s32.totalorder %v218, 0
    %vm223 = vcmp.lt.s32.totalorder %v197, 0
    %vm224 = vcmp.lt.s32.totalorder %v204, 0
    %vm225 = vcmp.lt.s32.totalorder %v211, 0
    %vm226 = vcmp.lt.s32.totalorder %v218, 0
    %vm227 = vmand %vm223, %vm219
    %vm228 = vmand %vm224, %vm220
    %vm229 = vmand %vm225, %vm221
    %vm230 = vmand %vm226, %vm222
    %v231 = vadd.s32 %v197, 16
    %v232 = vadd.s32 %v204, 16
    %v233 = vadd.s32 %v211, 16
    %v234 = vadd.s32 %v218, 16
    %v235 = vsel %vm227, %v231, %v197
    %v236 = vsel %vm228, %v232, %v204
    %v237 = vsel %vm229, %v233, %v211
    %v238 = vsel %vm230, %v234, %v218
    %vm239 = vcmp.eq.s32.totalorder %v235, 0
    %vm240 = vcmp.eq.s32.totalorder %v236, 0
    %vm241 = vcmp.eq.s32.totalorder %v237, 0
    %vm242 = vcmp.eq.s32.totalorder %v238, 0
    %vm243 = vcmp.eq.s32.totalorder %v235, 15
    %vm244 = vcmp.eq.s32.totalorder %v236, 15
    %vm245 = vcmp.eq.s32.totalorder %v237, 15
    %vm246 = vcmp.eq.s32.totalorder %v238, 15
    %v247 = vld [vmem:[%s2] sm:$0xff]
    %v248 = vld [vmem:[%s2 + $0x8] sm:$0xff]
    %v249 = vld [vmem:[%s2 + $0x10] sm:$0xff]
    %v250 = vld [vmem:[%s2 + $0x18] sm:$0xff]
    %v251 = vld [vmem:[%s2 + $0x20] sm:$0xff]
    %v252 = vld [vmem:[%s2 + $0x28] sm:$0xff]
    %v253 = vld [vmem:[%s2 + $0x30] sm:$0xff]
    %v254 = vld [vmem:[%s2 + $0x38] sm:$0xff]
    %v255 = vld [vmem:[%s2 + $0x40] sm:$0xff]
    %v256 = vld [vmem:[%s2 + $0x48] sm:$0xff]
    %v257 = vld [vmem:[%s2 + $0x50] sm:$0xff]
    %v258 = vld [vmem:[%s2 + $0x58] sm:$0xff]
    %v259 = vld [vmem:[%s2 + $0x60] sm:$0xff]
    %v260 = vld [vmem:[%s2 + $0x68] sm:$0xff]
    %v261 = vld [vmem:[%s2 + $0x70] sm:$0xff]
    %v262 = vld [vmem:[%s2 + $0x78] sm:$0xff]
    %v263 = vld [vmem:[%s2 + $0x80] sm:$0xff]
    %v264 = vld [vmem:[%s2 + $0x88] sm:$0xff]
    %v265 = vld [vmem:[%s2 + $0x90] sm:$0xff]
    %v266 = vld [vmem:[%s2 + $0x98] sm:$0xff]
    %v267 = vld [vmem:[%s2 + $0xa0] sm:$0xff]
    %v268 = vld [vmem:[%s2 + $0xa8] sm:$0xff]
    %v269 = vld [vmem:[%s2 + $0xb0] sm:$0xff]
    %v270 = vld [vmem:[%s2 + $0xb8] sm:$0xff]
    %v271 = vld [vmem:[%s2 + $0xc0] sm:$0xff]
    %v272 = vld [vmem:[%s2 + $0xc8] sm:$0xff]
    %v273 = vld [vmem:[%s2 + $0xd0] sm:$0xff]
    %v274 = vld [vmem:[%s2 + $0xd8] sm:$0xff]
    %v275 = vld [vmem:[%s2 + $0xe0] sm:$0xff]
    %v276 = vld [vmem:[%s2 + $0xe8] sm:$0xff]
    %v277 = vld [vmem:[%s2 + $0xf0] sm:$0xff]
    %v278 = vld [vmem:[%s2 + $0xf8] sm:$0xff]
    %vm279 = vcmask 523264
    %v281 = vsel %vm279, %v182, 0
    %v284 = vsel %vm279, %v183, 0
    %v287 = vsel %vm279, %v184, 0
    %v290 = vsel %vm279, %v185, 0
    %292 = vmatpush.msra.mxu0 0.0
    %293 = vmatpush.msra.mxu0 0.0
    %294 = vmatpush.msra.mxu0 0.0
    %295 = vmatpush.msra.mxu0 0.0
    %296 = vmatpush.msra.mxu0 0.0
    %297 = vmatpush.msra.mxu0 0.0
    %298 = vmatpush.msra.mxu0 0.0
    %299 = vmatpush.msra.mxu0 0.0
    %300 = vmatpush.msra.mxu0 %v275
    %301 = vmatpush.msra.mxu0 %v271
    %302 = vmatpush.msra.mxu0 %v267
    %303 = vmatpush.msra.mxu0 %v263
    %304 = vmatpush.msra.mxu0 %v259
    %305 = vmatpush.msra.mxu0 %v255
    %306 = vmatpush.msra.mxu0 %v251
    %307 = vmatpush.msra.mxu0 %v247
    %308 = vmatmul.f32.gmra.mxu0 %v281
    %v309 = vpop.f32.mrf.mxu0
    %v310 = vadd.f32 0.0, %v309
    %311 = vmatmul.f32.gmra.mxu0 %v284
    %v312 = vpop.f32.mrf.mxu0
    %v313 = vadd.f32 0.0, %v312
    %314 = vmatmul.f32.gmra.mxu0 %v287
    %v315 = vpop.f32.mrf.mxu0
    %v316 = vadd.f32 0.0, %v315
    %317 = vmatmul.f32.gmra.mxu0 %v290
    %v318 = vpop.f32.mrf.mxu0
    %v319 = vadd.f32 0.0, %v318
    %320 = vdwg.mxu0
    %321 = vmatpush.msra.mxu0 0.0
    %322 = vmatpush.msra.mxu0 0.0
    %323 = vmatpush.msra.mxu0 0.0
    %324 = vmatpush.msra.mxu0 0.0
    %325 = vmatpush.msra.mxu0 0.0
    %326 = vmatpush.msra.mxu0 0.0
    %327 = vmatpush.msra.mxu0 0.0
    %328 = vmatpush.msra.mxu0 0.0
    %329 = vmatpush.msra.mxu0 %v276
    %330 = vmatpush.msra.mxu0 %v272
    %331 = vmatpush.msra.mxu0 %v268
    %332 = vmatpush.msra.mxu0 %v264
    %333 = vmatpush.msra.mxu0 %v260
    %334 = vmatpush.msra.mxu0 %v256
    %335 = vmatpush.msra.mxu0 %v252
    %336 = vmatpush.msra.mxu0 %v248
    %337 = vmatmul.f32.gmra.mxu0 %v281
    %v338 = vpop.f32.mrf.mxu0
    %v339 = vadd.f32 0.0, %v338
    %340 = vmatmul.f32.gmra.mxu0 %v284
    %v341 = vpop.f32.mrf.mxu0
    %v342 = vadd.f32 0.0, %v341
    %343 = vmatmul.f32.gmra.mxu0 %v287
    %v344 = vpop.f32.mrf.mxu0
    %v345 = vadd.f32 0.0, %v344
    %346 = vmatmul.f32.gmra.mxu0 %v290
    %v347 = vpop.f32.mrf.mxu0
    %v348 = vadd.f32 0.0, %v347
    %349 = vdwg.mxu0
    %350 = vmatpush.msra.mxu0 0.0
    %351 = vmatpush.msra.mxu0 0.0
    %352 = vmatpush.msra.mxu0 0.0
    %353 = vmatpush.msra.mxu0 0.0
    %354 = vmatpush.msra.mxu0 0.0
    %355 = vmatpush.msra.mxu0 0.0
    %356 = vmatpush.msra.mxu0 0.0
    %357 = vmatpush.msra.mxu0 0.0
    %358 = vmatpush.msra.mxu0 %v277
    %359 = vmatpush.msra.mxu0 %v273
    %360 = vmatpush.msra.mxu0 %v269
    %361 = vmatpush.msra.mxu0 %v265
    %362 = vmatpush.msra.mxu0 %v261
    %363 = vmatpush.msra.mxu0 %v257
    %364 = vmatpush.msra.mxu0 %v253
    %365 = vmatpush.msra.mxu0 %v249
    %366 = vmatmul.f32.gmra.mxu0 %v281
    %v367 = vpop.f32.mrf.mxu0
    %v368 = vadd.f32 0.0, %v367
    %369 = vmatmul.f32.gmra.mxu0 %v284
    %v370 = vpop.f32.mrf.mxu0
    %v371 = vadd.f32 0.0, %v370
    %372 = vmatmul.f32.gmra.mxu0 %v287
    %v373 = vpop.f32.mrf.mxu0
    %v374 = vadd.f32 0.0, %v373
    %375 = vmatmul.f32.gmra.mxu0 %v290
    %v376 = vpop.f32.mrf.mxu0
    %v377 = vadd.f32 0.0, %v376
    %378 = vdwg.mxu0
    %379 = vmatpush.msra.mxu0 0.0
    %380 = vmatpush.msra.mxu0 0.0
    %381 = vmatpush.msra.mxu0 0.0
    %382 = vmatpush.msra.mxu0 0.0
    %383 = vmatpush.msra.mxu0 0.0
    %384 = vmatpush.msra.mxu0 0.0
    %385 = vmatpush.msra.mxu0 0.0
    %386 = vmatpush.msra.mxu0 0.0
    %387 = vmatpush.msra.mxu0 %v278
    %388 = vmatpush.msra.mxu0 %v274
    %389 = vmatpush.msra.mxu0 %v270
    %390 = vmatpush.msra.mxu0 %v266
    %391 = vmatpush.msra.mxu0 %v262
    %392 = vmatpush.msra.mxu0 %v258
    %393 = vmatpush.msra.mxu0 %v254
    %394 = vmatpush.msra.mxu0 %v250
    %395 = vmatmul.f32.gmra.mxu0 %v281
    %v396 = vpop.f32.mrf.mxu0
    %v397 = vadd.f32 0.0, %v396
    %398 = vmatmul.f32.gmra.mxu0 %v284
    %v399 = vpop.f32.mrf.mxu0
    %v400 = vadd.f32 0.0, %v399
    %401 = vmatmul.f32.gmra.mxu0 %v287
    %v402 = vpop.f32.mrf.mxu0
    %v403 = vadd.f32 0.0, %v402
    %404 = vmatmul.f32.gmra.mxu0 %v290
    %v405 = vpop.f32.mrf.mxu0
    %v406 = vadd.f32 0.0, %v405
    %407 = vdwg.mxu0
    %v408 = vld [vmem:[#allocation13] sm:$0x3]
    %v410 = vperm.slane %v408, 0
    %v411 = vperm.slane %v408, 1
    %v414 = vadd.f32 %v368, %v410
    %v415 = vadd.f32 %v397, %v411
    %v416 = vadd.f32 %v371, %v410
    %v417 = vadd.f32 %v400, %v411
    %v418 = vadd.f32 %v374, %v410
    %v419 = vadd.f32 %v403, %v411
    %v420 = vadd.f32 %v377, %v410
    %v421 = vadd.f32 %v406, %v411
    %v422 = vrot.slane %v182, 7
    %v423 = vrot.slane %v183, 7
    %v424 = vrot.slane %v184, 7
    %v425 = vrot.slane %v185, 7
    %vm426 = vcmp.lt.s32.totalorder %v187, 1
    %v427 = vsel %vm426, %v424, %v425
    %v428 = vsel %vm426, %v423, %v424
    %v429 = vsel %vm426, %v422, %v423
    %v430 = vsel %vm426, %v425, %v422
    %v431 = vsel %vm239, 1, 0
    %v432 = vsel %vm240, 1, 0
    %v433 = vsel %vm241, 1, 0
    %v434 = vsel %vm242, 1, 0
    %vm435 = vcmp.eq.s32.totalorder %v431, 1
    %vm436 = vcmp.eq.s32.totalorder %v432, 1
    %vm437 = vcmp.eq.s32.totalorder %v433, 1
    %vm438 = vcmp.eq.s32.totalorder %v434, 1
    %v439 = vsel %vm435, 0.0, %v430
    %v440 = vsel %vm436, 0.0, %v429
    %v441 = vsel %vm437, 0.0, %v428
    %v442 = vsel %vm438, 0.0, %v427
    %v443 = vld [vmem:[#allocation2] sm:$0xff]
    %v444 = vld [vmem:[#allocation2 + $0x8] sm:$0xff]
    %v445 = vld [vmem:[#allocation2 + $0x10] sm:$0xff]
    %v446 = vld [vmem:[#allocation2 + $0x18] sm:$0xff]
    %v447 = vld [vmem:[#allocation2 + $0x20] sm:$0xff]
    %v448 = vld [vmem:[#allocation2 + $0x28] sm:$0xff]
    %v449 = vld [vmem:[#allocation2 + $0x30] sm:$0xff]
    %v450 = vld [vmem:[#allocation2 + $0x38] sm:$0xff]
    %v451 = vld [vmem:[#allocation2 + $0x40] sm:$0xff]
    %v452 = vld [vmem:[#allocation2 + $0x48] sm:$0xff]
    %v453 = vld [vmem:[#allocation2 + $0x50] sm:$0xff]
    %v454 = vld [vmem:[#allocation2 + $0x58] sm:$0xff]
    %v455 = vld [vmem:[#allocation2 + $0x60] sm:$0xff]
    %v456 = vld [vmem:[#allocation2 + $0x68] sm:$0xff]
    %v457 = vld [vmem:[#allocation2 + $0x70] sm:$0xff]
    %v458 = vld [vmem:[#allocation2 + $0x78] sm:$0xff]
    %v460 = vsel %vm279, %v439, 0
    %v463 = vsel %vm279, %v440, 0
    %v466 = vsel %vm279, %v441, 0
    %v469 = vsel %vm279, %v442, 0
    %471 = vmatpush.msra.mxu0 0.0
    %472 = vmatpush.msra.mxu0 0.0
    %473 = vmatpush.msra.mxu0 0.0
    %474 = vmatpush.msra.mxu0 0.0
    %475 = vmatpush.msra.mxu0 0.0
    %476 = vmatpush.msra.mxu0 0.0
    %477 = vmatpush.msra.mxu0 0.0
    %478 = vmatpush.msra.mxu0 0.0
    %479 = vmatpush.msra.mxu0 %v457
    %480 = vmatpush.msra.mxu0 %v455
    %481 = vmatpush.msra.mxu0 %v453
    %482 = vmatpush.msra.mxu0 %v451
    %483 = vmatpush.msra.mxu0 %v449
    %484 = vmatpush.msra.mxu0 %v447
    %485 = vmatpush.msra.mxu0 %v445
    %486 = vmatpush.msra.mxu0 %v443
    %487 = vmatmul.f32.gmra.mxu0 %v460
    %v488 = vpop.f32.mrf.mxu0
    %v489 = vadd.f32 0.0, %v488
    %490 = vmatmul.f32.gmra.mxu0 %v463
    %v491 = vpop.f32.mrf.mxu0
    %v492 = vadd.f32 0.0, %v491
    %493 = vmatmul.f32.gmra.mxu0 %v466
    %v494 = vpop.f32.mrf.mxu0
    %v495 = vadd.f32 0.0, %v494
    %496 = vmatmul.f32.gmra.mxu0 %v469
    %v497 = vpop.f32.mrf.mxu0
    %v498 = vadd.f32 0.0, %v497
    %499 = vdwg.mxu0
    %500 = vmatpush.msra.mxu0 0.0
    %501 = vmatpush.msra.mxu0 0.0
    %502 = vmatpush.msra.mxu0 0.0
    %503 = vmatpush.msra.mxu0 0.0
    %504 = vmatpush.msra.mxu0 0.0
    %505 = vmatpush.msra.mxu0 0.0
    %506 = vmatpush.msra.mxu0 0.0
    %507 = vmatpush.msra.mxu0 0.0
    %508 = vmatpush.msra.mxu0 %v458
    %509 = vmatpush.msra.mxu0 %v456
    %510 = vmatpush.msra.mxu0 %v454
    %511 = vmatpush.msra.mxu0 %v452
    %512 = vmatpush.msra.mxu0 %v450
    %513 = vmatpush.msra.mxu0 %v448
    %514 = vmatpush.msra.mxu0 %v446
    %515 = vmatpush.msra.mxu0 %v444
    %516 = vmatmul.f32.gmra.mxu0 %v460
    %v517 = vpop.f32.mrf.mxu0
    %v518 = vadd.f32 0.0, %v517
    %519 = vmatmul.f32.gmra.mxu0 %v463
    %v520 = vpop.f32.mrf.mxu0
    %v521 = vadd.f32 0.0, %v520
    %522 = vmatmul.f32.gmra.mxu0 %v466
    %v523 = vpop.f32.mrf.mxu0
    %v524 = vadd.f32 0.0, %v523
    %525 = vmatmul.f32.gmra.mxu0 %v469
    %v526 = vpop.f32.mrf.mxu0
    %v527 = vadd.f32 0.0, %v526
    %528 = vdwg.mxu0
    %v529 = vadd.f32 %v310, %v489
    %v530 = vadd.f32 %v339, %v518
    %v531 = vadd.f32 %v313, %v492
    %v532 = vadd.f32 %v342, %v521
    %v533 = vadd.f32 %v316, %v495
    %v534 = vadd.f32 %v345, %v524
    %v535 = vadd.f32 %v319, %v498
    %v536 = vadd.f32 %v348, %v527
    %v537 = vrot.slane %v182, 1
    %v538 = vrot.slane %v183, 1
    %v539 = vrot.slane %v184, 1
    %v540 = vrot.slane %v185, 1
    %vm541 = vcmp.lt.s32.totalorder %v187, 7
    %v542 = vsel %vm541, %v539, %v540
    %v543 = vsel %vm541, %v538, %v539
    %v544 = vsel %vm541, %v537, %v538
    %v545 = vsel %vm541, %v540, %v537
    %v546 = vsel %vm243, 1, 0
    %v547 = vsel %vm244, 1, 0
    %v548 = vsel %vm245, 1, 0
    %v549 = vsel %vm246, 1, 0
    %vm550 = vcmp.eq.s32.totalorder %v546, 1
    %vm551 = vcmp.eq.s32.totalorder %v547, 1
    %vm552 = vcmp.eq.s32.totalorder %v548, 1
    %vm553 = vcmp.eq.s32.totalorder %v549, 1
    %v554 = vsel %vm550, 0.0, %v544
    %v555 = vsel %vm551, 0.0, %v543
    %v556 = vsel %vm552, 0.0, %v542
    %v557 = vsel %vm553, 0.0, %v545
    %v558 = vld [vmem:[#allocation5] sm:$0xff]
    %v559 = vld [vmem:[#allocation5 + $0x8] sm:$0xff]
    %v560 = vld [vmem:[#allocation5 + $0x10] sm:$0xff]
    %v561 = vld [vmem:[#allocation5 + $0x18] sm:$0xff]
    %v562 = vld [vmem:[#allocation5 + $0x20] sm:$0xff]
    %v563 = vld [vmem:[#allocation5 + $0x28] sm:$0xff]
    %v564 = vld [vmem:[#allocation5 + $0x30] sm:$0xff]
    %v565 = vld [vmem:[#allocation5 + $0x38] sm:$0xff]
    %v566 = vld [vmem:[#allocation5 + $0x40] sm:$0xff]
    %v567 = vld [vmem:[#allocation5 + $0x48] sm:$0xff]
    %v568 = vld [vmem:[#allocation5 + $0x50] sm:$0xff]
    %v569 = vld [vmem:[#allocation5 + $0x58] sm:$0xff]
    %v570 = vld [vmem:[#allocation5 + $0x60] sm:$0xff]
    %v571 = vld [vmem:[#allocation5 + $0x68] sm:$0xff]
    %v572 = vld [vmem:[#allocation5 + $0x70] sm:$0xff]
    %v573 = vld [vmem:[#allocation5 + $0x78] sm:$0xff]
    %v575 = vsel %vm279, %v554, 0
    %v578 = vsel %vm279, %v555, 0
    %v581 = vsel %vm279, %v556, 0
    %v584 = vsel %vm279, %v557, 0
    %586 = vmatpush.msra.mxu0 0.0
    %587 = vmatpush.msra.mxu0 0.0
    %588 = vmatpush.msra.mxu0 0.0
    %589 = vmatpush.msra.mxu0 0.0
    %590 = vmatpush.msra.mxu0 0.0
    %591 = vmatpush.msra.mxu0 0.0
    %592 = vmatpush.msra.mxu0 0.0
    %593 = vmatpush.msra.mxu0 0.0
    %594 = vmatpush.msra.mxu0 %v572
    %595 = vmatpush.msra.mxu0 %v570
    %596 = vmatpush.msra.mxu0 %v568
    %597 = vmatpush.msra.mxu0 %v566
    %598 = vmatpush.msra.mxu0 %v564
    %599 = vmatpush.msra.mxu0 %v562
    %600 = vmatpush.msra.mxu0 %v560
    %601 = vmatpush.msra.mxu0 %v558
    %602 = vmatmul.f32.gmra.mxu0 %v575
    %v603 = vpop.f32.mrf.mxu0
    %v604 = vadd.f32 0.0, %v603
    %605 = vmatmul.f32.gmra.mxu0 %v578
    %v606 = vpop.f32.mrf.mxu0
    %v607 = vadd.f32 0.0, %v606
    %608 = vmatmul.f32.gmra.mxu0 %v581
    %v609 = vpop.f32.mrf.mxu0
    %v610 = vadd.f32 0.0, %v609
    %611 = vmatmul.f32.gmra.mxu0 %v584
    %v612 = vpop.f32.mrf.mxu0
    %v613 = vadd.f32 0.0, %v612
    %614 = vdwg.mxu0
    %615 = vmatpush.msra.mxu0 0.0
    %616 = vmatpush.msra.mxu0 0.0
    %617 = vmatpush.msra.mxu0 0.0
    %618 = vmatpush.msra.mxu0 0.0
    %619 = vmatpush.msra.mxu0 0.0
    %620 = vmatpush.msra.mxu0 0.0
    %621 = vmatpush.msra.mxu0 0.0
    %622 = vmatpush.msra.mxu0 0.0
    %623 = vmatpush.msra.mxu0 %v573
    %624 = vmatpush.msra.mxu0 %v571
    %625 = vmatpush.msra.mxu0 %v569
    %626 = vmatpush.msra.mxu0 %v567
    %627 = vmatpush.msra.mxu0 %v565
    %628 = vmatpush.msra.mxu0 %v563
    %629 = vmatpush.msra.mxu0 %v561
    %630 = vmatpush.msra.mxu0 %v559
    %631 = vmatmul.f32.gmra.mxu0 %v575
    %v632 = vpop.f32.mrf.mxu0
    %v633 = vadd.f32 0.0, %v632
    %634 = vmatmul.f32.gmra.mxu0 %v578
    %v635 = vpop.f32.mrf.mxu0
    %v636 = vadd.f32 0.0, %v635
    %637 = vmatmul.f32.gmra.mxu0 %v581
    %v638 = vpop.f32.mrf.mxu0
    %v639 = vadd.f32 0.0, %v638
    %640 = vmatmul.f32.gmra.mxu0 %v584
    %v641 = vpop.f32.mrf.mxu0
    %v642 = vadd.f32 0.0, %v641
    %643 = vdwg.mxu0
    %v644 = vadd.f32 %v529, %v604
    %v645 = vadd.f32 %v530, %v633
    %v646 = vadd.f32 %v531, %v607
    %v647 = vadd.f32 %v532, %v636
    %v648 = vadd.f32 %v533, %v610
    %v649 = vadd.f32 %v534, %v639
    %v650 = vadd.f32 %v535, %v613
    %v651 = vadd.f32 %v536, %v642
    %v652 = vld [vmem:[%s4] sm:$0x3]
    %v654 = vperm.slane %v652, 0
    %v655 = vperm.slane %v652, 1
    %v658 = vadd.f32 %v644, %v654
    %v659 = vadd.f32 %v645, %v655
    %v660 = vadd.f32 %v646, %v654
    %v661 = vadd.f32 %v647, %v655
    %v662 = vadd.f32 %v648, %v654
    %v663 = vadd.f32 %v649, %v655
    %v664 = vadd.f32 %v650, %v654
    %v665 = vadd.f32 %v651, %v655
    %v666 = vmax.f32 %v658, 0.0
    %v667 = vmax.f32 %v659, 0.0
    %v668 = vmax.f32 %v660, 0.0
    %v669 = vmax.f32 %v661, 0.0
    %v670 = vmax.f32 %v662, 0.0
    %v671 = vmax.f32 %v663, 0.0
    %v672 = vmax.f32 %v664, 0.0
    %v673 = vmax.f32 %v665, 0.0
    %v674 = vld [vmem:[#allocation8] sm:$0xff]
    %v675 = vld [vmem:[#allocation8 + $0x8] sm:$0xff]
    %v676 = vld [vmem:[#allocation8 + $0x10] sm:$0xff]
    %v677 = vld [vmem:[#allocation8 + $0x18] sm:$0xff]
    %v678 = vld [vmem:[#allocation8 + $0x20] sm:$0xff]
    %v679 = vld [vmem:[#allocation8 + $0x28] sm:$0xff]
    %v680 = vld [vmem:[#allocation8 + $0x30] sm:$0xff]
    %v681 = vld [vmem:[#allocation8 + $0x38] sm:$0xff]
    %v682 = vld [vmem:[#allocation8 + $0x40] sm:$0xff]
    %v683 = vld [vmem:[#allocation8 + $0x48] sm:$0xff]
    %v684 = vld [vmem:[#allocation8 + $0x50] sm:$0xff]
    %v685 = vld [vmem:[#allocation8 + $0x58] sm:$0xff]
    %v686 = vld [vmem:[#allocation8 + $0x60] sm:$0xff]
    %v687 = vld [vmem:[#allocation8 + $0x68] sm:$0xff]
    %v688 = vld [vmem:[#allocation8 + $0x70] sm:$0xff]
    %v689 = vld [vmem:[#allocation8 + $0x78] sm:$0xff]
    %v690 = vld [vmem:[#allocation8 + $0x80] sm:$0xff]
    %v691 = vld [vmem:[#allocation8 + $0x88] sm:$0xff]
    %v692 = vld [vmem:[#allocation8 + $0x90] sm:$0xff]
    %v693 = vld [vmem:[#allocation8 + $0x98] sm:$0xff]
    %v694 = vld [vmem:[#allocation8 + $0xa0] sm:$0xff]
    %v695 = vld [vmem:[#allocation8 + $0xa8] sm:$0xff]
    %v696 = vld [vmem:[#allocation8 + $0xb0] sm:$0xff]
    %v697 = vld [vmem:[#allocation8 + $0xb8] sm:$0xff]
    %v698 = vld [vmem:[#allocation8 + $0xc0] sm:$0xff]
    %v699 = vld [vmem:[#allocation8 + $0xc8] sm:$0xff]
    %v700 = vld [vmem:[#allocation8 + $0xd0] sm:$0xff]
    %v701 = vld [vmem:[#allocation8 + $0xd8] sm:$0xff]
    %v702 = vld [vmem:[#allocation8 + $0xe0] sm:$0xff]
    %v703 = vld [vmem:[#allocation8 + $0xe8] sm:$0xff]
    %v704 = vld [vmem:[#allocation8 + $0xf0] sm:$0xff]
    %v705 = vld [vmem:[#allocation8 + $0xf8] sm:$0xff]
    %v706 = vld [vmem:[#allocation8 + $0x100] sm:$0xff]
    %v707 = vld [vmem:[#allocation8 + $0x108] sm:$0xff]
    %v708 = vld [vmem:[#allocation8 + $0x110] sm:$0xff]
    %v709 = vld [vmem:[#allocation8 + $0x118] sm:$0xff]
    %v710 = vld [vmem:[#allocation8 + $0x120] sm:$0xff]
    %v711 = vld [vmem:[#allocation8 + $0x128] sm:$0xff]
    %v712 = vld [vmem:[#allocation8 + $0x130] sm:$0xff]
    %v713 = vld [vmem:[#allocation8 + $0x138] sm:$0xff]
    %v714 = vld [vmem:[#allocation8 + $0x140] sm:$0xff]
    %v715 = vld [vmem:[#allocation8 + $0x148] sm:$0xff]
    %v716 = vld [vmem:[#allocation8 + $0x150] sm:$0xff]
    %v717 = vld [vmem:[#allocation8 + $0x158] sm:$0xff]
    %v718 = vld [vmem:[#allocation8 + $0x160] sm:$0xff]
    %v719 = vld [vmem:[#allocation8 + $0x168] sm:$0xff]
    %v720 = vld [vmem:[#allocation8 + $0x170] sm:$0xff]
    %v721 = vld [vmem:[#allocation8 + $0x178] sm:$0xff]
    %v722 = vld [vmem:[#allocation8 + $0x180] sm:$0xff]
    %v723 = vld [vmem:[#allocation8 + $0x188] sm:$0xff]
    %v724 = vld [vmem:[#allocation8 + $0x190] sm:$0xff]
    %v725 = vld [vmem:[#allocation8 + $0x198] sm:$0xff]
    %v726 = vld [vmem:[#allocation8 + $0x1a0] sm:$0xff]
    %v727 = vld [vmem:[#allocation8 + $0x1a8] sm:$0xff]
    %v728 = vld [vmem:[#allocation8 + $0x1b0] sm:$0xff]
    %v729 = vld [vmem:[#allocation8 + $0x1b8] sm:$0xff]
    %v730 = vld [vmem:[#allocation8 + $0x1c0] sm:$0xff]
    %v731 = vld [vmem:[#allocation8 + $0x1c8] sm:$0xff]
    %v732 = vld [vmem:[#allocation8 + $0x1d0] sm:$0xff]
    %v733 = vld [vmem:[#allocation8 + $0x1d8] sm:$0xff]
    %v734 = vld [vmem:[#allocation8 + $0x1e0] sm:$0xff]
    %v735 = vld [vmem:[#allocation8 + $0x1e8] sm:$0xff]
    %v736 = vld [vmem:[#allocation8 + $0x1f0] sm:$0xff]
    %v737 = vld [vmem:[#allocation8 + $0x1f8] sm:$0xff]
    %v738 = vrot.slane %v666, 7
    %v739 = vrot.slane %v667, 7
    %v740 = vrot.slane %v668, 7
    %v741 = vrot.slane %v669, 7
    %v742 = vrot.slane %v670, 7
    %v743 = vrot.slane %v671, 7
    %v744 = vrot.slane %v672, 7
    %v745 = vrot.slane %v673, 7
    %v746 = vsel %vm426, %v742, %v744
    %v747 = vsel %vm426, %v743, %v745
    %v748 = vsel %vm426, %v740, %v742
    %v749 = vsel %vm426, %v741, %v743
    %v750 = vsel %vm426, %v738, %v740
    %v751 = vsel %vm426, %v739, %v741
    %v752 = vsel %vm426, %v744, %v738
    %v753 = vsel %vm426, %v745, %v739
    %v754 = vsel %vm435, 0.0, %v752
    %v755 = vsel %vm435, 0.0, %v753
    %v756 = vsel %vm436, 0.0, %v750
    %v757 = vsel %vm436, 0.0, %v751
    %v758 = vsel %vm437, 0.0, %v748
    %v759 = vsel %vm437, 0.0, %v749
    %v760 = vsel %vm438, 0.0, %v746
    %v761 = vsel %vm438, 0.0, %v747
    %v762 = vld [vmem:[#allocation7] sm:$0xff]
    %v763 = vld [vmem:[#allocation7 + $0x8] sm:$0xff]
    %v764 = vld [vmem:[#allocation7 + $0x10] sm:$0xff]
    %v765 = vld [vmem:[#allocation7 + $0x18] sm:$0xff]
    %v766 = vld [vmem:[#allocation7 + $0x20] sm:$0xff]
    %v767 = vld [vmem:[#allocation7 + $0x28] sm:$0xff]
    %v768 = vld [vmem:[#allocation7 + $0x30] sm:$0xff]
    %v769 = vld [vmem:[#allocation7 + $0x38] sm:$0xff]
    %v770 = vld [vmem:[#allocation7 + $0x40] sm:$0xff]
    %v771 = vld [vmem:[#allocation7 + $0x48] sm:$0xff]
    %v772 = vld [vmem:[#allocation7 + $0x50] sm:$0xff]
    %v773 = vld [vmem:[#allocation7 + $0x58] sm:$0xff]
    %v774 = vld [vmem:[#allocation7 + $0x60] sm:$0xff]
    %v775 = vld [vmem:[#allocation7 + $0x68] sm:$0xff]
    %v776 = vld [vmem:[#allocation7 + $0x70] sm:$0xff]
    %v777 = vld [vmem:[#allocation7 + $0x78] sm:$0xff]
    %v778 = vld [vmem:[#allocation7 + $0x80] sm:$0xff]
    %v779 = vld [vmem:[#allocation7 + $0x88] sm:$0xff]
    %v780 = vld [vmem:[#allocation7 + $0x90] sm:$0xff]
    %v781 = vld [vmem:[#allocation7 + $0x98] sm:$0xff]
    %v782 = vld [vmem:[#allocation7 + $0xa0] sm:$0xff]
    %v783 = vld [vmem:[#allocation7 + $0xa8] sm:$0xff]
    %v784 = vld [vmem:[#allocation7 + $0xb0] sm:$0xff]
    %v785 = vld [vmem:[#allocation7 + $0xb8] sm:$0xff]
    %v786 = vld [vmem:[#allocation7 + $0xc0] sm:$0xff]
    %v787 = vld [vmem:[#allocation7 + $0xc8] sm:$0xff]
    %v788 = vld [vmem:[#allocation7 + $0xd0] sm:$0xff]
    %v789 = vld [vmem:[#allocation7 + $0xd8] sm:$0xff]
    %v790 = vld [vmem:[#allocation7 + $0xe0] sm:$0xff]
    %v791 = vld [vmem:[#allocation7 + $0xe8] sm:$0xff]
    %v792 = vld [vmem:[#allocation7 + $0xf0] sm:$0xff]
    %v793 = vld [vmem:[#allocation7 + $0xf8] sm:$0xff]
    %v794 = vld [vmem:[#allocation7 + $0x100] sm:$0xff]
    %v795 = vld [vmem:[#allocation7 + $0x108] sm:$0xff]
    %v796 = vld [vmem:[#allocation7 + $0x110] sm:$0xff]
    %v797 = vld [vmem:[#allocation7 + $0x118] sm:$0xff]
    %v798 = vld [vmem:[#allocation7 + $0x120] sm:$0xff]
    %v799 = vld [vmem:[#allocation7 + $0x128] sm:$0xff]
    %v800 = vld [vmem:[#allocation7 + $0x130] sm:$0xff]
    %v801 = vld [vmem:[#allocation7 + $0x138] sm:$0xff]
    %v802 = vld [vmem:[#allocation7 + $0x140] sm:$0xff]
    %v803 = vld [vmem:[#allocation7 + $0x148] sm:$0xff]
    %v804 = vld [vmem:[#allocation7 + $0x150] sm:$0xff]
    %v805 = vld [vmem:[#allocation7 + $0x158] sm:$0xff]
    %v806 = vld [vmem:[#allocation7 + $0x160] sm:$0xff]
    %v807 = vld [vmem:[#allocation7 + $0x168] sm:$0xff]
    %v808 = vld [vmem:[#allocation7 + $0x170] sm:$0xff]
    %v809 = vld [vmem:[#allocation7 + $0x178] sm:$0xff]
    %v810 = vld [vmem:[#allocation7 + $0x180] sm:$0xff]
    %v811 = vld [vmem:[#allocation7 + $0x188] sm:$0xff]
    %v812 = vld [vmem:[#allocation7 + $0x190] sm:$0xff]
    %v813 = vld [vmem:[#allocation7 + $0x198] sm:$0xff]
    %v814 = vld [vmem:[#allocation7 + $0x1a0] sm:$0xff]
    %v815 = vld [vmem:[#allocation7 + $0x1a8] sm:$0xff]
    %v816 = vld [vmem:[#allocation7 + $0x1b0] sm:$0xff]
    %v817 = vld [vmem:[#allocation7 + $0x1b8] sm:$0xff]
    %v818 = vld [vmem:[#allocation7 + $0x1c0] sm:$0xff]
    %v819 = vld [vmem:[#allocation7 + $0x1c8] sm:$0xff]
    %v820 = vld [vmem:[#allocation7 + $0x1d0] sm:$0xff]
    %v821 = vld [vmem:[#allocation7 + $0x1d8] sm:$0xff]
    %v822 = vld [vmem:[#allocation7 + $0x1e0] sm:$0xff]
    %v823 = vld [vmem:[#allocation7 + $0x1e8] sm:$0xff]
    %v824 = vld [vmem:[#allocation7 + $0x1f0] sm:$0xff]
    %v825 = vld [vmem:[#allocation7 + $0x1f8] sm:$0xff]
    %826 = vmatpush.msra.mxu0 %v792
    %827 = vmatpush.msra.mxu0 %v790
    %828 = vmatpush.msra.mxu0 %v788
    %829 = vmatpush.msra.mxu0 %v786
    %830 = vmatpush.msra.mxu0 %v784
    %831 = vmatpush.msra.mxu0 %v782
    %832 = vmatpush.msra.mxu0 %v780
    %833 = vmatpush.msra.mxu0 %v778
    %834 = vmatpush.msra.mxu0 %v776
    %835 = vmatpush.msra.mxu0 %v774
    %836 = vmatpush.msra.mxu0 %v772
    %837 = vmatpush.msra.mxu0 %v770
    %838 = vmatpush.msra.mxu0 %v768
    %839 = vmatpush.msra.mxu0 %v766
    %840 = vmatpush.msra.mxu0 %v764
    %841 = vmatpush.msra.mxu0 %v762
    %842 = vmatmul.f32.gmra.mxu0 %v754
    %v843 = vpop.f32.mrf.mxu0
    %v844 = vadd.f32 0.0, %v843
    %845 = vmatmul.f32.gmra.mxu0 %v756
    %v846 = vpop.f32.mrf.mxu0
    %v847 = vadd.f32 0.0, %v846
    %848 = vmatmul.f32.gmra.mxu0 %v758
    %v849 = vpop.f32.mrf.mxu0
    %v850 = vadd.f32 0.0, %v849
    %851 = vmatmul.f32.gmra.mxu0 %v760
    %v852 = vpop.f32.mrf.mxu0
    %v853 = vadd.f32 0.0, %v852
    %854 = vdwg.mxu0
    %855 = vmatpush.msra.mxu0 %v824
    %856 = vmatpush.msra.mxu0 %v822
    %857 = vmatpush.msra.mxu0 %v820
    %858 = vmatpush.msra.mxu0 %v818
    %859 = vmatpush.msra.mxu0 %v816
    %860 = vmatpush.msra.mxu0 %v814
    %861 = vmatpush.msra.mxu0 %v812
    %862 = vmatpush.msra.mxu0 %v810
    %863 = vmatpush.msra.mxu0 %v808
    %864 = vmatpush.msra.mxu0 %v806
    %865 = vmatpush.msra.mxu0 %v804
    %866 = vmatpush.msra.mxu0 %v802
    %867 = vmatpush.msra.mxu0 %v800
    %868 = vmatpush.msra.mxu0 %v798
    %869 = vmatpush.msra.mxu0 %v796
    %870 = vmatpush.msra.mxu0 %v794
    %871 = vmatmul.f32.gmra.mxu0 %v755
    %v872 = vpop.f32.mrf.mxu0
    %v873 = vadd.f32 %v844, %v872
    %874 = vmatmul.f32.gmra.mxu0 %v757
    %v875 = vpop.f32.mrf.mxu0
    %v876 = vadd.f32 %v847, %v875
    %877 = vmatmul.f32.gmra.mxu0 %v759
    %v878 = vpop.f32.mrf.mxu0
    %v879 = vadd.f32 %v850, %v878
    %880 = vmatmul.f32.gmra.mxu0 %v761
    %v881 = vpop.f32.mrf.mxu0
    %v882 = vadd.f32 %v853, %v881
    %883 = vdwg.mxu0
    %884 = vmatpush.msra.mxu0 %v793
    %885 = vmatpush.msra.mxu0 %v791
    %886 = vmatpush.msra.mxu0 %v789
    %887 = vmatpush.msra.mxu0 %v787
    %888 = vmatpush.msra.mxu0 %v785
    %889 = vmatpush.msra.mxu0 %v783
    %890 = vmatpush.msra.mxu0 %v781
    %891 = vmatpush.msra.mxu0 %v779
    %892 = vmatpush.msra.mxu0 %v777
    %893 = vmatpush.msra.mxu0 %v775
    %894 = vmatpush.msra.mxu0 %v773
    %895 = vmatpush.msra.mxu0 %v771
    %896 = vmatpush.msra.mxu0 %v769
    %897 = vmatpush.msra.mxu0 %v767
    %898 = vmatpush.msra.mxu0 %v765
    %899 = vmatpush.msra.mxu0 %v763
    %900 = vmatmul.f32.gmra.mxu0 %v754
    %v901 = vpop.f32.mrf.mxu0
    %v902 = vadd.f32 0.0, %v901
    %903 = vmatmul.f32.gmra.mxu0 %v756
    %v904 = vpop.f32.mrf.mxu0
    %v905 = vadd.f32 0.0, %v904
    %906 = vmatmul.f32.gmra.mxu0 %v758
    %v907 = vpop.f32.mrf.mxu0
    %v908 = vadd.f32 0.0, %v907
    %909 = vmatmul.f32.gmra.mxu0 %v760
    %v910 = vpop.f32.mrf.mxu0
    %v911 = vadd.f32 0.0, %v910
    %912 = vdwg.mxu0
    %913 = vmatpush.msra.mxu0 %v825
    %914 = vmatpush.msra.mxu0 %v823
    %915 = vmatpush.msra.mxu0 %v821
    %916 = vmatpush.msra.mxu0 %v819
    %917 = vmatpush.msra.mxu0 %v817
    %918 = vmatpush.msra.mxu0 %v815
    %919 = vmatpush.msra.mxu0 %v813
    %920 = vmatpush.msra.mxu0 %v811
    %921 = vmatpush.msra.mxu0 %v809
    %922 = vmatpush.msra.mxu0 %v807
    %923 = vmatpush.msra.mxu0 %v805
    %924 = vmatpush.msra.mxu0 %v803
    %925 = vmatpush.msra.mxu0 %v801
    %926 = vmatpush.msra.mxu0 %v799
    %927 = vmatpush.msra.mxu0 %v797
    %928 = vmatpush.msra.mxu0 %v795
    %929 = vmatmul.f32.gmra.mxu0 %v755
    %v930 = vpop.f32.mrf.mxu0
    %v931 = vadd.f32 %v902, %v930
    %932 = vmatmul.f32.gmra.mxu0 %v757
    %v933 = vpop.f32.mrf.mxu0
    %v934 = vadd.f32 %v905, %v933
    %935 = vmatmul.f32.gmra.mxu0 %v759
    %v936 = vpop.f32.mrf.mxu0
    %v937 = vadd.f32 %v908, %v936
    %938 = vmatmul.f32.gmra.mxu0 %v761
    %v939 = vpop.f32.mrf.mxu0
    %v940 = vadd.f32 %v911, %v939
    %941 = vdwg.mxu0
    %942 = vmatpush.msra.mxu0 %v704
    %943 = vmatpush.msra.mxu0 %v702
    %944 = vmatpush.msra.mxu0 %v700
    %945 = vmatpush.msra.mxu0 %v698
    %946 = vmatpush.msra.mxu0 %v696
    %947 = vmatpush.msra.mxu0 %v694
    %948 = vmatpush.msra.mxu0 %v692
    %949 = vmatpush.msra.mxu0 %v690
    %950 = vmatpush.msra.mxu0 %v688
    %951 = vmatpush.msra.mxu0 %v686
    %952 = vmatpush.msra.mxu0 %v684
    %953 = vmatpush.msra.mxu0 %v682
    %954 = vmatpush.msra.mxu0 %v680
    %955 = vmatpush.msra.mxu0 %v678
    %956 = vmatpush.msra.mxu0 %v676
    %957 = vmatpush.msra.mxu0 %v674
    %958 = vmatmul.f32.gmra.mxu0 %v666
    %v959 = vpop.f32.mrf.mxu0
    %v960 = vadd.f32 %v873, %v959
    %961 = vmatmul.f32.gmra.mxu0 %v668
    %v962 = vpop.f32.mrf.mxu0
    %v963 = vadd.f32 %v876, %v962
    %964 = vmatmul.f32.gmra.mxu0 %v670
    %v965 = vpop.f32.mrf.mxu0
    %v966 = vadd.f32 %v879, %v965
    %967 = vmatmul.f32.gmra.mxu0 %v672
    %v968 = vpop.f32.mrf.mxu0
    %v969 = vadd.f32 %v882, %v968
    %970 = vdwg.mxu0
    %971 = vmatpush.msra.mxu0 %v736
    %972 = vmatpush.msra.mxu0 %v734
    %973 = vmatpush.msra.mxu0 %v732
    %974 = vmatpush.msra.mxu0 %v730
    %975 = vmatpush.msra.mxu0 %v728
    %976 = vmatpush.msra.mxu0 %v726
    %977 = vmatpush.msra.mxu0 %v724
    %978 = vmatpush.msra.mxu0 %v722
    %979 = vmatpush.msra.mxu0 %v720
    %980 = vmatpush.msra.mxu0 %v718
    %981 = vmatpush.msra.mxu0 %v716
    %982 = vmatpush.msra.mxu0 %v714
    %983 = vmatpush.msra.mxu0 %v712
    %984 = vmatpush.msra.mxu0 %v710
    %985 = vmatpush.msra.mxu0 %v708
    %986 = vmatpush.msra.mxu0 %v706
    %987 = vmatmul.f32.gmra.mxu0 %v667
    %v988 = vpop.f32.mrf.mxu0
    %v989 = vadd.f32 %v960, %v988
    %990 = vmatmul.f32.gmra.mxu0 %v669
    %v991 = vpop.f32.mrf.mxu0
    %v992 = vadd.f32 %v963, %v991
    %993 = vmatmul.f32.gmra.mxu0 %v671
    %v994 = vpop.f32.mrf.mxu0
    %v995 = vadd.f32 %v966, %v994
    %996 = vmatmul.f32.gmra.mxu0 %v673
    %v997 = vpop.f32.mrf.mxu0
    %v998 = vadd.f32 %v969, %v997
    %999 = vdwg.mxu0
    %1000 = vmatpush.msra.mxu0 %v705
    %1001 = vmatpush.msra.mxu0 %v703
    %1002 = vmatpush.msra.mxu0 %v701
    %1003 = vmatpush.msra.mxu0 %v699
    %1004 = vmatpush.msra.mxu0 %v697
    %1005 = vmatpush.msra.mxu0 %v695
    %1006 = vmatpush.msra.mxu0 %v693
    %1007 = vmatpush.msra.mxu0 %v691
    %1008 = vmatpush.msra.mxu0 %v689
    %1009 = vmatpush.msra.mxu0 %v687
    %1010 = vmatpush.msra.mxu0 %v685
    %1011 = vmatpush.msra.mxu0 %v683
    %1012 = vmatpush.msra.mxu0 %v681
    %1013 = vmatpush.msra.mxu0 %v679
    %1014 = vmatpush.msra.mxu0 %v677
    %1015 = vmatpush.msra.mxu0 %v675
    %1016 = vmatmul.f32.gmra.mxu0 %v666
    %v1017 = vpop.f32.mrf.mxu0
    %v1018 = vadd.f32 %v931, %v1017
    %1019 = vmatmul.f32.gmra.mxu0 %v668
    %v1020 = vpop.f32.mrf.mxu0
    %v1021 = vadd.f32 %v934, %v1020
    %1022 = vmatmul.f32.gmra.mxu0 %v670
    %v1023 = vpop.f32.mrf.mxu0
    %v1024 = vadd.f32 %v937, %v1023
    %1025 = vmatmul.f32.gmra.mxu0 %v672
    %v1026 = vpop.f32.mrf.mxu0
    %v1027 = vadd.f32 %v940, %v1026
    %1028 = vdwg.mxu0
    %1029 = vmatpush.msra.mxu0 %v737
    %1030 = vmatpush.msra.mxu0 %v735
    %1031 = vmatpush.msra.mxu0 %v733
    %1032 = vmatpush.msra.mxu0 %v731
    %1033 = vmatpush.msra.mxu0 %v729
    %1034 = vmatpush.msra.mxu0 %v727
    %1035 = vmatpush.msra.mxu0 %v725
    %1036 = vmatpush.msra.mxu0 %v723
    %1037 = vmatpush.msra.mxu0 %v721
    %1038 = vmatpush.msra.mxu0 %v719
    %1039 = vmatpush.msra.mxu0 %v717
    %1040 = vmatpush.msra.mxu0 %v715
    %1041 = vmatpush.msra.mxu0 %v713
    %1042 = vmatpush.msra.mxu0 %v711
    %1043 = vmatpush.msra.mxu0 %v709
    %1044 = vmatpush.msra.mxu0 %v707
    %1045 = vmatmul.f32.gmra.mxu0 %v667
    %v1046 = vpop.f32.mrf.mxu0
    %v1047 = vadd.f32 %v1018, %v1046
    %1048 = vmatmul.f32.gmra.mxu0 %v669
    %v1049 = vpop.f32.mrf.mxu0
    %v1050 = vadd.f32 %v1021, %v1049
    %1051 = vmatmul.f32.gmra.mxu0 %v671
    %v1052 = vpop.f32.mrf.mxu0
    %v1053 = vadd.f32 %v1024, %v1052
    %1054 = vmatmul.f32.gmra.mxu0 %v673
    %v1055 = vpop.f32.mrf.mxu0
    %v1056 = vadd.f32 %v1027, %v1055
    %1057 = vdwg.mxu0
    %v1058 = vrot.slane %v666, 1
    %v1059 = vrot.slane %v667, 1
    %v1060 = vrot.slane %v668, 1
    %v1061 = vrot.slane %v669, 1
    %v1062 = vrot.slane %v670, 1
    %v1063 = vrot.slane %v671, 1
    %v1064 = vrot.slane %v672, 1
    %v1065 = vrot.slane %v673, 1
    %v1066 = vsel %vm541, %v1062, %v1064
    %v1067 = vsel %vm541, %v1063, %v1065
    %v1068 = vsel %vm541, %v1060, %v1062
    %v1069 = vsel %vm541, %v1061, %v1063
    %v1070 = vsel %vm541, %v1058, %v1060
    %v1071 = vsel %vm541, %v1059, %v1061
    %v1072 = vsel %vm541, %v1064, %v1058
    %v1073 = vsel %vm541, %v1065, %v1059
    %v1074 = vsel %vm550, 0.0, %v1070
    %v1075 = vsel %vm550, 0.0, %v1071
    %v1076 = vsel %vm551, 0.0, %v1068
    %v1077 = vsel %vm551, 0.0, %v1069
    %v1078 = vsel %vm552, 0.0, %v1066
    %v1079 = vsel %vm552, 0.0, %v1067
    %v1080 = vsel %vm553, 0.0, %v1072
    %v1081 = vsel %vm553, 0.0, %v1073
    %v1082 = vld [vmem:[#allocation10] sm:$0xff]
    %v1083 = vld [vmem:[#allocation10 + $0x8] sm:$0xff]
    %v1084 = vld [vmem:[#allocation10 + $0x10] sm:$0xff]
    %v1085 = vld [vmem:[#allocation10 + $0x18] sm:$0xff]
    %v1086 = vld [vmem:[#allocation10 + $0x20] sm:$0xff]
    %v1087 = vld [vmem:[#allocation10 + $0x28] sm:$0xff]
    %v1088 = vld [vmem:[#allocation10 + $0x30] sm:$0xff]
    %v1089 = vld [vmem:[#allocation10 + $0x38] sm:$0xff]
    %v1090 = vld [vmem:[#allocation10 + $0x40] sm:$0xff]
    %v1091 = vld [vmem:[#allocation10 + $0x48] sm:$0xff]
    %v1092 = vld [vmem:[#allocation10 + $0x50] sm:$0xff]
    %v1093 = vld [vmem:[#allocation10 + $0x58] sm:$0xff]
    %v1094 = vld [vmem:[#allocation10 + $0x60] sm:$0xff]
    %v1095 = vld [vmem:[#allocation10 + $0x68] sm:$0xff]
    %v1096 = vld [vmem:[#allocation10 + $0x70] sm:$0xff]
    %v1097 = vld [vmem:[#allocation10 + $0x78] sm:$0xff]
    %v1098 = vld [vmem:[#allocation10 + $0x80] sm:$0xff]
    %v1099 = vld [vmem:[#allocation10 + $0x88] sm:$0xff]
    %v1100 = vld [vmem:[#allocation10 + $0x90] sm:$0xff]
    %v1101 = vld [vmem:[#allocation10 + $0x98] sm:$0xff]
    %v1102 = vld [vmem:[#allocation10 + $0xa0] sm:$0xff]
    %v1103 = vld [vmem:[#allocation10 + $0xa8] sm:$0xff]
    %v1104 = vld [vmem:[#allocation10 + $0xb0] sm:$0xff]
    %v1105 = vld [vmem:[#allocation10 + $0xb8] sm:$0xff]
    %v1106 = vld [vmem:[#allocation10 + $0xc0] sm:$0xff]
    %v1107 = vld [vmem:[#allocation10 + $0xc8] sm:$0xff]
    %v1108 = vld [vmem:[#allocation10 + $0xd0] sm:$0xff]
    %v1109 = vld [vmem:[#allocation10 + $0xd8] sm:$0xff]
    %v1110 = vld [vmem:[#allocation10 + $0xe0] sm:$0xff]
    %v1111 = vld [vmem:[#allocation10 + $0xe8] sm:$0xff]
    %v1112 = vld [vmem:[#allocation10 + $0xf0] sm:$0xff]
    %v1113 = vld [vmem:[#allocation10 + $0xf8] sm:$0xff]
    %v1114 = vld [vmem:[#allocation10 + $0x100] sm:$0xff]
    %v1115 = vld [vmem:[#allocation10 + $0x108] sm:$0xff]
    %v1116 = vld [vmem:[#allocation10 + $0x110] sm:$0xff]
    %v1117 = vld [vmem:[#allocation10 + $0x118] sm:$0xff]
    %v1118 = vld [vmem:[#allocation10 + $0x120] sm:$0xff]
    %v1119 = vld [vmem:[#allocation10 + $0x128] sm:$0xff]
    %v1120 = vld [vmem:[#allocation10 + $0x130] sm:$0xff]
    %v1121 = vld [vmem:[#allocation10 + $0x138] sm:$0xff]
    %v1122 = vld [vmem:[#allocation10 + $0x140] sm:$0xff]
    %v1123 = vld [vmem:[#allocation10 + $0x148] sm:$0xff]
    %v1124 = vld [vmem:[#allocation10 + $0x150] sm:$0xff]
    %v1125 = vld [vmem:[#allocation10 + $0x158] sm:$0xff]
    %v1126 = vld [vmem:[#allocation10 + $0x160] sm:$0xff]
    %v1127 = vld [vmem:[#allocation10 + $0x168] sm:$0xff]
    %v1128 = vld [vmem:[#allocation10 + $0x170] sm:$0xff]
    %v1129 = vld [vmem:[#allocation10 + $0x178] sm:$0xff]
    %v1130 = vld [vmem:[#allocation10 + $0x180] sm:$0xff]
    %v1131 = vld [vmem:[#allocation10 + $0x188] sm:$0xff]
    %v1132 = vld [vmem:[#allocation10 + $0x190] sm:$0xff]
    %v1133 = vld [vmem:[#allocation10 + $0x198] sm:$0xff]
    %v1134 = vld [vmem:[#allocation10 + $0x1a0] sm:$0xff]
    %v1135 = vld [vmem:[#allocation10 + $0x1a8] sm:$0xff]
    %v1136 = vld [vmem:[#allocation10 + $0x1b0] sm:$0xff]
    %v1137 = vld [vmem:[#allocation10 + $0x1b8] sm:$0xff]
    %v1138 = vld [vmem:[#allocation10 + $0x1c0] sm:$0xff]
    %v1139 = vld [vmem:[#allocation10 + $0x1c8] sm:$0xff]
    %v1140 = vld [vmem:[#allocation10 + $0x1d0] sm:$0xff]
    %v1141 = vld [vmem:[#allocation10 + $0x1d8] sm:$0xff]
    %v1142 = vld [vmem:[#allocation10 + $0x1e0] sm:$0xff]
    %v1143 = vld [vmem:[#allocation10 + $0x1e8] sm:$0xff]
    %v1144 = vld [vmem:[#allocation10 + $0x1f0] sm:$0xff]
    %v1145 = vld [vmem:[#allocation10 + $0x1f8] sm:$0xff]
    %1146 = vmatpush.msra.mxu0 %v1112
    %1147 = vmatpush.msra.mxu0 %v1110
    %1148 = vmatpush.msra.mxu0 %v1108
    %1149 = vmatpush.msra.mxu0 %v1106
    %1150 = vmatpush.msra.mxu0 %v1104
    %1151 = vmatpush.msra.mxu0 %v1102
    %1152 = vmatpush.msra.mxu0 %v1100
    %1153 = vmatpush.msra.mxu0 %v1098
    %1154 = vmatpush.msra.mxu0 %v1096
    %1155 = vmatpush.msra.mxu0 %v1094
    %1156 = vmatpush.msra.mxu0 %v1092
    %1157 = vmatpush.msra.mxu0 %v1090
    %1158 = vmatpush.msra.mxu0 %v1088
    %1159 = vmatpush.msra.mxu0 %v1086
    %1160 = vmatpush.msra.mxu0 %v1084
    %1161 = vmatpush.msra.mxu0 %v1082
    %1162 = vmatmul.f32.gmra.mxu0 %v1074
    %v1163 = vpop.f32.mrf.mxu0
    %v1164 = vadd.f32 0.0, %v1163
    %1165 = vmatmul.f32.gmra.mxu0 %v1076
    %v1166 = vpop.f32.mrf.mxu0
    %v1167 = vadd.f32 0.0, %v1166
    %1168 = vmatmul.f32.gmra.mxu0 %v1078
    %v1169 = vpop.f32.mrf.mxu0
    %v1170 = vadd.f32 0.0, %v1169
    %1171 = vmatmul.f32.gmra.mxu0 %v1080
    %v1172 = vpop.f32.mrf.mxu0
    %v1173 = vadd.f32 0.0, %v1172
    %1174 = vdwg.mxu0
    %1175 = vmatpush.msra.mxu0 %v1144
    %1176 = vmatpush.msra.mxu0 %v1142
    %1177 = vmatpush.msra.mxu0 %v1140
    %1178 = vmatpush.msra.mxu0 %v1138
    %1179 = vmatpush.msra.mxu0 %v1136
    %1180 = vmatpush.msra.mxu0 %v1134
    %1181 = vmatpush.msra.mxu0 %v1132
    %1182 = vmatpush.msra.mxu0 %v1130
    %1183 = vmatpush.msra.mxu0 %v1128
    %1184 = vmatpush.msra.mxu0 %v1126
    %1185 = vmatpush.msra.mxu0 %v1124
    %1186 = vmatpush.msra.mxu0 %v1122
    %1187 = vmatpush.msra.mxu0 %v1120
    %1188 = vmatpush.msra.mxu0 %v1118
    %1189 = vmatpush.msra.mxu0 %v1116
    %1190 = vmatpush.msra.mxu0 %v1114
    %1191 = vmatmul.f32.gmra.mxu0 %v1075
    %v1192 = vpop.f32.mrf.mxu0
    %v1193 = vadd.f32 %v1164, %v1192
    %1194 = vmatmul.f32.gmra.mxu0 %v1077
    %v1195 = vpop.f32.mrf.mxu0
    %v1196 = vadd.f32 %v1167, %v1195
    %1197 = vmatmul.f32.gmra.mxu0 %v1079
    %v1198 = vpop.f32.mrf.mxu0
    %v1199 = vadd.f32 %v1170, %v1198
    %1200 = vmatmul.f32.gmra.mxu0 %v1081
    %v1201 = vpop.f32.mrf.mxu0
    %v1202 = vadd.f32 %v1173, %v1201
    %1203 = vdwg.mxu0
    %1204 = vmatpush.msra.mxu0 %v1113
    %1205 = vmatpush.msra.mxu0 %v1111
    %1206 = vmatpush.msra.mxu0 %v1109
    %1207 = vmatpush.msra.mxu0 %v1107
    %1208 = vmatpush.msra.mxu0 %v1105
    %1209 = vmatpush.msra.mxu0 %v1103
    %1210 = vmatpush.msra.mxu0 %v1101
    %1211 = vmatpush.msra.mxu0 %v1099
    %1212 = vmatpush.msra.mxu0 %v1097
    %1213 = vmatpush.msra.mxu0 %v1095
    %1214 = vmatpush.msra.mxu0 %v1093
    %1215 = vmatpush.msra.mxu0 %v1091
    %1216 = vmatpush.msra.mxu0 %v1089
    %1217 = vmatpush.msra.mxu0 %v1087
    %1218 = vmatpush.msra.mxu0 %v1085
    %1219 = vmatpush.msra.mxu0 %v1083
    %1220 = vmatmul.f32.gmra.mxu0 %v1074
    %v1221 = vpop.f32.mrf.mxu0
    %v1222 = vadd.f32 0.0, %v1221
    %1223 = vmatmul.f32.gmra.mxu0 %v1076
    %v1224 = vpop.f32.mrf.mxu0
    %v1225 = vadd.f32 0.0, %v1224
    %1226 = vmatmul.f32.gmra.mxu0 %v1078
    %v1227 = vpop.f32.mrf.mxu0
    %v1228 = vadd.f32 0.0, %v1227
    %1229 = vmatmul.f32.gmra.mxu0 %v1080
    %v1230 = vpop.f32.mrf.mxu0
    %v1231 = vadd.f32 0.0, %v1230
    %1232 = vdwg.mxu0
    %1233 = vmatpush.msra.mxu0 %v1145
    %1234 = vmatpush.msra.mxu0 %v1143
    %1235 = vmatpush.msra.mxu0 %v1141
    %1236 = vmatpush.msra.mxu0 %v1139
    %1237 = vmatpush.msra.mxu0 %v1137
    %1238 = vmatpush.msra.mxu0 %v1135
    %1239 = vmatpush.msra.mxu0 %v1133
    %1240 = vmatpush.msra.mxu0 %v1131
    %1241 = vmatpush.msra.mxu0 %v1129
    %1242 = vmatpush.msra.mxu0 %v1127
    %1243 = vmatpush.msra.mxu0 %v1125
    %1244 = vmatpush.msra.mxu0 %v1123
    %1245 = vmatpush.msra.mxu0 %v1121
    %1246 = vmatpush.msra.mxu0 %v1119
    %1247 = vmatpush.msra.mxu0 %v1117
    %1248 = vmatpush.msra.mxu0 %v1115
    %1249 = vmatmul.f32.gmra.mxu0 %v1075
    %v1250 = vpop.f32.mrf.mxu0
    %v1251 = vadd.f32 %v1222, %v1250
    %1252 = vmatmul.f32.gmra.mxu0 %v1077
    %v1253 = vpop.f32.mrf.mxu0
    %v1254 = vadd.f32 %v1225, %v1253
    %1255 = vmatmul.f32.gmra.mxu0 %v1079
    %v1256 = vpop.f32.mrf.mxu0
    %v1257 = vadd.f32 %v1228, %v1256
    %1258 = vmatmul.f32.gmra.mxu0 %v1081
    %v1259 = vpop.f32.mrf.mxu0
    %v1260 = vadd.f32 %v1231, %v1259
    %1261 = vdwg.mxu0
    %v1262 = vadd.f32 %v989, %v1193
    %v1263 = vadd.f32 %v1047, %v1251
    %v1264 = vadd.f32 %v992, %v1196
    %v1265 = vadd.f32 %v1050, %v1254
    %v1266 = vadd.f32 %v995, %v1199
    %v1267 = vadd.f32 %v1053, %v1257
    %v1268 = vadd.f32 %v998, %v1202
    %v1269 = vadd.f32 %v1056, %v1260
    %v1270 = vld [vmem:[#allocation11] sm:$0x3]
    %v1272 = vperm.slane %v1270, 0
    %v1273 = vperm.slane %v1270, 1
    %v1276 = vadd.f32 %v1262, %v1272
    %v1277 = vadd.f32 %v1263, %v1273
    %v1278 = vadd.f32 %v1264, %v1272
    %v1279 = vadd.f32 %v1265, %v1273
    %v1280 = vadd.f32 %v1266, %v1272
    %v1281 = vadd.f32 %v1267, %v1273
    %v1282 = vadd.f32 %v1268, %v1272
    %v1283 = vadd.f32 %v1269, %v1273
    %v1284 = vadd.f32 %v1276, %v1278
    %v1285 = vrot.slane %v1284, 4
    %v1286 = vadd.f32 %v1284, %v1285
    %v1287 = vrot.slane %v1286, 2
    %v1288 = vadd.f32 %v1286, %v1287
    %v1289 = vrot.slane %v1288, 1
    %v1290 = vadd.f32 %v1288, %v1289
    %v1291 = vadd.f32 %v1277, %v1279
    %v1292 = vrot.slane %v1291, 4
    %v1293 = vadd.f32 %v1291, %v1292
    %v1294 = vrot.slane %v1293, 2
    %v1295 = vadd.f32 %v1293, %v1294
    %v1296 = vrot.slane %v1295, 1
    %v1297 = vadd.f32 %v1295, %v1296
    %v1298 = vadd.f32 %v1280, %v1282
    %v1299 = vrot.slane %v1298, 4
    %v1300 = vadd.f32 %v1298, %v1299
    %v1301 = vrot.slane %v1300, 2
    %v1302 = vadd.f32 %v1300, %v1301
    %v1303 = vrot.slane %v1302, 1
    %v1304 = vadd.f32 %v1302, %v1303
    %v1305 = vadd.f32 %v1281, %v1283
    %v1306 = vrot.slane %v1305, 4
    %v1307 = vadd.f32 %v1305, %v1306
    %v1308 = vrot.slane %v1307, 2
    %v1309 = vadd.f32 %v1307, %v1308
    %v1310 = vrot.slane %v1309, 1
    %v1311 = vadd.f32 %v1309, %v1310
    %v1312 = vmul.f32 %v1290, 0.00390625
    %v1313 = vmul.f32 %v1297, 0.00390625
    %v1314 = vmul.f32 %v1304, 0.00390625
    %v1315 = vmul.f32 %v1311, 0.00390625
    %v1316 = vld [vmem:[%s12] sm:$0xff]
    %v1317 = vld [vmem:[%s12 + $0x8] sm:$0xff]
    %v1318 = vld [vmem:[%s12 + $0x10] sm:$0xff]
    %v1319 = vld [vmem:[%s12 + $0x18] sm:$0xff]
    %v1320 = vld [vmem:[%s12 + $0x20] sm:$0xff]
    %v1321 = vld [vmem:[%s12 + $0x28] sm:$0xff]
    %v1322 = vld [vmem:[%s12 + $0x30] sm:$0xff]
    %v1323 = vld [vmem:[%s12 + $0x38] sm:$0xff]
    %v1324 = vld [vmem:[%s12 + $0x40] sm:$0xff]
    %v1325 = vld [vmem:[%s12 + $0x48] sm:$0xff]
    %v1326 = vld [vmem:[%s12 + $0x50] sm:$0xff]
    %v1327 = vld [vmem:[%s12 + $0x58] sm:$0xff]
    %v1328 = vld [vmem:[%s12 + $0x60] sm:$0xff]
    %v1329 = vld [vmem:[%s12 + $0x68] sm:$0xff]
    %v1330 = vld [vmem:[%s12 + $0x70] sm:$0xff]
    %v1331 = vld [vmem:[%s12 + $0x78] sm:$0xff]
    %v1332 = vld [vmem:[%s12 + $0x80] sm:$0xff]
    %v1333 = vld [vmem:[%s12 + $0x88] sm:$0xff]
    %v1334 = vld [vmem:[%s12 + $0x90] sm:$0xff]
    %v1335 = vld [vmem:[%s12 + $0x98] sm:$0xff]
    %v1336 = vld [vmem:[%s12 + $0xa0] sm:$0xff]
    %v1337 = vld [vmem:[%s12 + $0xa8] sm:$0xff]
    %v1338 = vld [vmem:[%s12 + $0xb0] sm:$0xff]
    %v1339 = vld [vmem:[%s12 + $0xb8] sm:$0xff]
    %v1340 = vld [vmem:[%s12 + $0xc0] sm:$0xff]
    %v1341 = vld [vmem:[%s12 + $0xc8] sm:$0xff]
    %v1342 = vld [vmem:[%s12 + $0xd0] sm:$0xff]
    %v1343 = vld [vmem:[%s12 + $0xd8] sm:$0xff]
    %v1344 = vld [vmem:[%s12 + $0xe0] sm:$0xff]
    %v1345 = vld [vmem:[%s12 + $0xe8] sm:$0xff]
    %v1346 = vld [vmem:[%s12 + $0xf0] sm:$0xff]
    %v1347 = vld [vmem:[%s12 + $0xf8] sm:$0xff]
    %vm1352 = vcmask 1041409
    %v1353 = vsel %vm1352, %v1314, %v1312
    %v1354 = vsel %vm1352, %v1315, %v1313
    %1357 = vmatpush.msra.mxu0 %v1331
    %1358 = vmatpush.msra.mxu0 %v1330
    %1359 = vmatpush.msra.mxu0 %v1329
    %1360 = vmatpush.msra.mxu0 %v1328
    %1361 = vmatpush.msra.mxu0 %v1327
    %1362 = vmatpush.msra.mxu0 %v1326
    %1363 = vmatpush.msra.mxu0 %v1325
    %1364 = vmatpush.msra.mxu0 %v1324
    %1365 = vmatpush.msra.mxu0 %v1323
    %1366 = vmatpush.msra.mxu0 %v1322
    %1367 = vmatpush.msra.mxu0 %v1321
    %1368 = vmatpush.msra.mxu0 %v1320
    %1369 = vmatpush.msra.mxu0 %v1319
    %1370 = vmatpush.msra.mxu0 %v1318
    %1371 = vmatpush.msra.mxu0 %v1317
    %1372 = vmatpush.msra.mxu0 %v1316
    %1373 = vmatmul.f32.gmra.mxu0 %v1353
    %v1374 = vpop.f32.mrf.mxu0
    %v1375 = vadd.f32 0.0, %v1374
    %1376 = vdwg.mxu0
    %1377 = vmatpush.msra.mxu0 %v1347
    %1378 = vmatpush.msra.mxu0 %v1346
    %1379 = vmatpush.msra.mxu0 %v1345
    %1380 = vmatpush.msra.mxu0 %v1344
    %1381 = vmatpush.msra.mxu0 %v1343
    %1382 = vmatpush.msra.mxu0 %v1342
    %1383 = vmatpush.msra.mxu0 %v1341
    %1384 = vmatpush.msra.mxu0 %v1340
    %1385 = vmatpush.msra.mxu0 %v1339
    %1386 = vmatpush.msra.mxu0 %v1338
    %1387 = vmatpush.msra.mxu0 %v1337
    %1388 = vmatpush.msra.mxu0 %v1336
    %1389 = vmatpush.msra.mxu0 %v1335
    %1390 = vmatpush.msra.mxu0 %v1334
    %1391 = vmatpush.msra.mxu0 %v1333
    %1392 = vmatpush.msra.mxu0 %v1332
    %1393 = vmatmul.f32.gmra.mxu0 %v1354
    %v1394 = vpop.f32.mrf.mxu0
    %v1395 = vadd.f32 %v1375, %v1394
    %1396 = vdwg.mxu0
    %v1397 = vld [vmem:[%s10] sm:$0xff]
    %v1398 = vld [vmem:[%s10 + $0x8] sm:$0xff]
    %vm1399 = vcmask 130048
    %v1401 = vsel %vm1399, %v1395, 0
    %1403 = vmatpush.msra.mxu0 0.0
    %1404 = vmatpush.msra.mxu0 0.0
    %1405 = vmatpush.msra.mxu0 0.0
    %1406 = vmatpush.msra.mxu0 0.0
    %1407 = vmatpush.msra.mxu0 0.0
    %1408 = vmatpush.msra.mxu0 0.0
    %1409 = vmatpush.msra.mxu0 0.0
    %1410 = vmatpush.msra.mxu0 0.0
    %1411 = vmatpush.msra.mxu0 0.0
    %1412 = vmatpush.msra.mxu0 0.0
    %1413 = vmatpush.msra.mxu0 0.0
    %1414 = vmatpush.msra.mxu0 0.0
    %1415 = vmatpush.msra.mxu0 0.0
    %1416 = vmatpush.msra.mxu0 0.0
    %1417 = vmatpush.msra.mxu0 %v1398
    %1418 = vmatpush.msra.mxu0 %v1397
    %1419 = vmatmul.f32.gmra.mxu0 %v1401
    %v1420 = vpop.f32.mrf.mxu0
    %v1421 = vadd.f32 0.0, %v1420
    %1422 = vdwg.mxu0
    %v1423 = vmax.f32 %v1421, 0.0
    %v1424 = vld [vmem:[#allocation14] sm:$0xff]
    %vm1425 = vcmask 64512
    %v1427 = vsel %vm1425, %v1423, 0
    %1429 = vmatpush.msra.mxu0 0.0
    %1430 = vmatpush.msra.mxu0 0.0
    %1431 = vmatpush.msra.mxu0 0.0
    %1432 = vmatpush.msra.mxu0 0.0
    %1433 = vmatpush.msra.mxu0 0.0
    %1434 = vmatpush.msra.mxu0 0.0
    %1435 = vmatpush.msra.mxu0 0.0
    %1436 = vmatpush.msra.mxu0 0.0
    %1437 = vmatpush.msra.mxu0 0.0
    %1438 = vmatpush.msra.mxu0 0.0
    %1439 = vmatpush.msra.mxu0 0.0
    %1440 = vmatpush.msra.mxu0 0.0
    %1441 = vmatpush.msra.mxu0 0.0
    %1442 = vmatpush.msra.mxu0 0.0
    %1443 = vmatpush.msra.mxu0 0.0
    %1444 = vmatpush.msra.mxu0 %v1424
    %1445 = vmatmul.f32.gmra.mxu0 %v1427
    %v1446 = vpop.f32.mrf.mxu0
    %v1447 = vadd.f32 0.0, %v1446
    %1448 = vdwg.mxu0
    %v1449 = vxor.u32 %v1447, 2147483648
    %v1450 = vmul.f32 %v1449, 1.442695
    %v1451 = vpow.pop %v1450
    %v1452 = vadd.f32 %v1451, 1.0
    %v1453 = vrcp.pop %v1452
    %v1454 = vmul.f32 %v1452, %v1453
    %v1455 = vsub.f32 1.0, %v1454
    %v1456 = vmul.f32 %v1453, %v1455
    %v1457 = vadd.f32 %v1453, %v1456
    %vm1458 = vweird.f32 %v1452
    %vm1459 = vweird.f32 %v1453
    %vm1460 = vmor %vm1458, %vm1459
    %v1461 = vsel %vm1460, %v1453, %v1457
    %v1462 = vand.u32 2147483647, %v1452
    %vm1463 = vcmp.eq.f32.partialorder %v1462, 8.507059e+37
    %v1464 = vand.u32 %v1452, 2147483648
    %v1465 = vor.u32 1.1754944e-38, %v1464
    %v1466 = vsel %vm1463, %v1465, %v1461
    %v1467 = vmul.f32 1.0, %v1466
    %v1468 = vld [vmem:[#allocation16] sm:$0xff]
    %v1469 = vld [vmem:[#allocation16 + $0x8] sm:$0xff]
    %v1470 = vld [vmem:[#allocation16 + $0x10] sm:$0xff]
    %v1471 = vld [vmem:[#allocation16 + $0x18] sm:$0xff]
    %v1473 = vsel %vm1399, %v1467, 0
    %1475 = vmatpush.msra.mxu0 0.0
    %1476 = vmatpush.msra.mxu0 0.0
    %1477 = vmatpush.msra.mxu0 0.0
    %1478 = vmatpush.msra.mxu0 0.0
    %1479 = vmatpush.msra.mxu0 0.0
    %1480 = vmatpush.msra.mxu0 0.0
    %1481 = vmatpush.msra.mxu0 0.0
    %1482 = vmatpush.msra.mxu0 0.0
    %1483 = vmatpush.msra.mxu0 0.0
    %1484 = vmatpush.msra.mxu0 0.0
    %1485 = vmatpush.msra.mxu0 0.0
    %1486 = vmatpush.msra.mxu0 0.0
    %1487 = vmatpush.msra.mxu0 0.0
    %1488 = vmatpush.msra.mxu0 0.0
    %1489 = vmatpush.msra.mxu0 %v1470
    %1490 = vmatpush.msra.mxu0 %v1468
    %1491 = vmatmul.f32.gmra.mxu0 %v1473
    %v1492 = vpop.f32.mrf.mxu0
    %v1493 = vadd.f32 0.0, %v1492
    %1494 = vdwg.mxu0
    %1495 = vmatpush.msra.mxu0 0.0
    %1496 = vmatpush.msra.mxu0 0.0
    %1497 = vmatpush.msra.mxu0 0.0
    %1498 = vmatpush.msra.mxu0 0.0
    %1499 = vmatpush.msra.mxu0 0.0
    %1500 = vmatpush.msra.mxu0 0.0
    %1501 = vmatpush.msra.mxu0 0.0
    %1502 = vmatpush.msra.mxu0 0.0
    %1503 = vmatpush.msra.mxu0 0.0
    %1504 = vmatpush.msra.mxu0 0.0
    %1505 = vmatpush.msra.mxu0 0.0
    %1506 = vmatpush.msra.mxu0 0.0
    %1507 = vmatpush.msra.mxu0 0.0
    %1508 = vmatpush.msra.mxu0 0.0
    %1509 = vmatpush.msra.mxu0 %v1471
    %1510 = vmatpush.msra.mxu0 %v1469
    %1511 = vmatmul.f32.gmra.mxu0 %v1473
    %v1512 = vpop.f32.mrf.mxu0
    %v1513 = vadd.f32 0.0, %v1512
    %1514 = vdwg.mxu0
    %v1517 = vrot.slane %v1513, 7
    %vm1518 = vcmask 1040384
    %v1519 = vsel %vm1518, %v1493, %v1517
    %v1520 = vsel %vm1352, %v1493, %v1517
    %v1521 = vrot.slane %v1520, 1
    %v1522 = vperm.slane %v1519, 0
    %v1523 = vperm.slane %v1519, 1
    %v1524 = vperm.slane %v1521, 0
    %v1525 = vperm.slane %v1521, 1
    %v1530 = vmul.f32 %v1276, %v1522
    %v1531 = vmul.f32 %v1277, %v1523
    %v1532 = vmul.f32 %v1278, %v1522
    %v1533 = vmul.f32 %v1279, %v1523
    %v1534 = vmul.f32 %v1280, %v1524
    %v1535 = vmul.f32 %v1281, %v1525
    %v1536 = vmul.f32 %v1282, %v1524
    %v1537 = vmul.f32 %v1283, %v1525
    %v1538 = vadd.f32 %v1530, %v414
    %v1539 = vadd.f32 %v1531, %v415
    %v1540 = vadd.f32 %v1532, %v416
    %v1541 = vadd.f32 %v1533, %v417
    %v1542 = vadd.f32 %v1534, %v418
    %v1543 = vadd.f32 %v1535, %v419
    %v1544 = vadd.f32 %v1536, %v420
    %v1545 = vadd.f32 %v1537, %v421
    %v1546 = vmax.f32 %v1538, 0.0
    %v1547 = vmax.f32 %v1539, 0.0
    %v1548 = vmax.f32 %v1540, 0.0
    %v1549 = vmax.f32 %v1541, 0.0
    %v1550 = vmax.f32 %v1542, 0.0
    %v1551 = vmax.f32 %v1543, 0.0
    %v1552 = vmax.f32 %v1544, 0.0
    %v1553 = vmax.f32 %v1545, 0.0
    %1554 = vst [vmem:[#allocation17] sm:$0xff] %v1546
    %1555 = vst [vmem:[#allocation17 + $0x8] sm:$0xff] %v1547
    %1556 = vst [vmem:[#allocation17 + $0x10] sm:$0xff] %v1548
    %1557 = vst [vmem:[#allocation17 + $0x18] sm:$0xff] %v1549
    %1558 = vst [vmem:[#allocation17 + $0x20] sm:$0xff] %v1550
    %1559 = vst [vmem:[#allocation17 + $0x28] sm:$0xff] %v1551
    %1560 = vst [vmem:[#allocation17 + $0x30] sm:$0xff] %v1552
    %1561 = vst [vmem:[#allocation17 + $0x38] sm:$0xff] %v1553
    // Predicated region
    $region94: #{tpu_custom_call.1} parent=1 // pred_check
      _
    $region95: #{tpu_custom_call.1} parent=1 // pred_check_branch
      %1563 = sbr.rel (0) target = $region97
    $region96: #{tpu_custom_call.1} parent=1 // pred_region
      %1565 = vsyncadd [#allocation4], 0
      %s1566 = sshll.u32 [#allocation17], 4
      %s1567 = int_to_ptr.vmem [resolvable:$true] %s1566
      %s1568 = sshll.u32 %s14, 4
      %s1569 = int_to_ptr.hbm [resolvable:$true] %s1568
      %1574 = dma.vmem_to_hbm [thread:$0]  %s1567, 1024, %s1569, [#allocation4], 256, 256, 16
    $region97: #{tpu_custom_call.1} parent=1 // pred_fallthru
      _
    // Predicated region
    $region98: #{tpu_custom_call.1} parent=1 // pred_check
      _
    $region99: #{tpu_custom_call.1} parent=1 // pred_check_branch
      %1576 = sbr.rel (0) target = $region101
    $region100: #{tpu_custom_call.1} parent=1 // pred_region
      %1578 = dma.done [#allocation4], 1024
    $region101: #{tpu_custom_call.1} parent=1 // pred_fallthru
      _
    %1579 = vsyncpa [#allocation3], 1
    %1580 = vsyncpa [#allocation6], 1
    %1581 = vsyncpa [#allocation9], 1
    %1582 = vsyncpa [#allocation12], 1
    %1583 = vsyncpa [#allocation15], 1
    %1584 = vsyncpa [#allocation4], 1

</llo_original>
